<compile_context>
chip_gen: v7x
topology: tpu7x:2x2x1
jax: 0.10.0
libtpu: 0.0.40
codegen_flags: <defaults>
</compile_context>

<pallas_src>
import functools
import math

import jax
import jax.numpy as jnp
from jax import lax
from jax.experimental import pallas as pl
from jax.experimental.pallas import tpu as pltpu


def _attention_kernel(xq_ref, xk_ref, xv_ref,
                      wqt_ref, wkt_ref, wvt_ref,
                      bq_ref, bk_ref, bv_ref,
                      out_ref, attn_ref,
                      *, b_blk: int, seq: int):
    """One grid step handles b_blk batch elements.

    xq/xk/xv : (b_blk*seq, D) f32      wqt/wkt/wvt : (D, D) bf16, pre-transposed
                                       (wqt additionally pre-scaled by 1/sqrt(D))
    bq/bk/bv : (1, D) f32 (bq pre-scaled)
    out      : (b_blk*seq, D) f32
    attn     : (b_blk, seq, seq) f32
    """
    mx_dt = wqt_ref.dtype  # MXU input dtype (bf16)

    # --- projections: one full-height (b_blk*S, D) @ (D, D) matmul each ---
    q = jnp.dot(xq_ref[...].astype(mx_dt), wqt_ref[...],
                preferred_element_type=jnp.float32) + bq_ref[...]
    k = jnp.dot(xk_ref[...].astype(mx_dt), wkt_ref[...],
                preferred_element_type=jnp.float32) + bk_ref[...]
    v = jnp.dot(xv_ref[...].astype(mx_dt), wvt_ref[...],
                preferred_element_type=jnp.float32) + bv_ref[...]

    qc, kc, vc = q.astype(mx_dt), k.astype(mx_dt), v.astype(mx_dt)

    for i in range(b_blk):  # static trip count -> fully unrolled
        lo = i * seq
        qi = qc[lo:lo + seq, :]   # (S, D) sublane-aligned static slices
        ki = kc[lo:lo + seq, :]
        vi = vc[lo:lo + seq, :]

        # scores_i = (q_i / sqrt(d_k)) @ k_i^T; scale already folded into Wq/bq.
        # Contract the last dims directly -- no transposed operand materialized.
        s_i = lax.dot_general(qi, ki,
                              dimension_numbers=(((1,), (1,)), ((), ())),
                              preferred_element_type=jnp.float32)

        # numerically-stable softmax in f32; normalization on the EUP (approx recip)
        m_i = jnp.max(s_i, axis=-1, keepdims=True)
        e_i = jnp.exp(s_i - m_i)
        a_i = e_i * pl.reciprocal(jnp.sum(e_i, axis=-1, keepdims=True),
                                  approx=True)

        # output_i = attn_i @ v_i
        o_i = jnp.dot(a_i.astype(mx_dt), vi, preferred_element_type=jnp.float32)
        out_ref[lo:lo + seq, :] = o_i.astype(out_ref.dtype)

        # exact f32 attention weights, written at a static leading index
        attn_ref[i] = a_i.astype(attn_ref.dtype)


def simple_attention(query, key, value, wq, wk, wv, bq, bk, bv,
                     *, compute_dtype=jnp.bfloat16):
    """Pallas TPU implementation of SimpleAttention.forward.

    query/key/value: (B, S, D) f32;  wq/wk/wv: (D, D) nn.Linear weights (out, in);
    bq/bk/bv: (D,) biases.  Returns (output (B, S, D), attn_weights (B, S, S)).
    """
    B, S, D = query.shape
    assert key.shape == (B, S, D) and value.shape == (B, S, D)

    # Two parallel grid steps when possible (one per TensorCore on v7x megacore,
    # harmless on single-TC v5e/v6e); otherwise fall back to one batch per step.
    if B % 2 == 0:
        num_steps, b_blk = 2, B // 2
    else:
        num_steps, b_blk = B, 1

    scale = 1.0 / math.sqrt(D)  # d_k == d_model
    # nn.Linear computes x @ W.T + b: pre-transpose the weights (and fold the
    # 1/sqrt(d_k) score scale into the Q projection); cast weights to bf16 once.
    wqt = (wq.T * scale).astype(compute_dtype)
    wkt = wk.T.astype(compute_dtype)
    wvt = wv.T.astype(compute_dtype)
    bq2 = (bq * scale).reshape(1, D).astype(jnp.float32)
    bk2 = bk.reshape(1, D).astype(jnp.float32)
    bv2 = bv.reshape(1, D).astype(jnp.float32)

    # Flatten (B, S, D) -> (B*S, D) on the wrapper side so each grid step sees one
    # big (b_blk*S, D) tile and the projections are single full-height matmuls.
    qf = query.reshape(B * S, D)
    kf = key.reshape(B * S, D)
    vf = value.reshape(B * S, D)

    rows = b_blk * S
    x_spec = pl.BlockSpec((rows, D), lambda b: (b, 0))
    w_spec = pl.BlockSpec((D, D), lambda b: (0, 0))   # constant block: fetched once
    b_spec = pl.BlockSpec((1, D), lambda b: (0, 0))

    kernel = functools.partial(_attention_kernel, b_blk=b_blk, seq=S)

    out_flat, attn = pl.pallas_call(
        kernel,
        out_shape=(
            jax.ShapeDtypeStruct((B * S, D), query.dtype),
            jax.ShapeDtypeStruct((B, S, S), jnp.float32),
        ),
        grid_spec=pltpu.PrefetchScalarGridSpec(
            num_scalar_prefetch=0,
            grid=(num_steps,),
            in_specs=[x_spec, x_spec, x_spec,
                      w_spec, w_spec, w_spec,
                      b_spec, b_spec, b_spec],
            out_specs=[
                x_spec,                                           # output rows
                pl.BlockSpec((b_blk, S, S), lambda b: (b, 0, 0)),  # attn weights
            ],
        ),
        compiler_params=pltpu.CompilerParams(
            dimension_semantics=("parallel",)),
    )(qf, kf, vf, wqt, wkt, wvt, bq2, bk2, bv2)

    out = out_flat.reshape(B, S, D)
    return out, attn


def _reference(query, key, value, wq, wk, wv, bq, bk, bv):
    q = query @ wq.T + bq
    k = key @ wk.T + bk
    v = value @ wv.T + bv
    scores = jnp.einsum("bqd,bkd->bqk", q, k) / (k.shape[-1] ** 0.5)
    attn = jax.nn.softmax(scores, axis=-1)
    out = jnp.einsum("bqk,bkd->bqd", attn, v)
    return out, attn


if __name__ == "__main__":
    # Small stand-in for the module's (10, 32, 512) tensors (same batch/seq, D=128).
    B, S, D = 10, 32, 128

    root = jax.random.PRNGKey(0)
    kq, kk, kv, kwq, kwk, kwv, kbq, kbk, kbv = jax.random.split(root, 9)

    query = jax.random.uniform(kq, (B, S, D), dtype=jnp.float32)
    key_x = jax.random.uniform(kk, (B, S, D), dtype=jnp.float32)
    value = jax.random.uniform(kv, (B, S, D), dtype=jnp.float32)

    bound = 1.0 / math.sqrt(D)  # nn.Linear default init range
    wq = jax.random.uniform(kwq, (D, D), minval=-bound, maxval=bound, dtype=jnp.float32)
    wk = jax.random.uniform(kwk, (D, D), minval=-bound, maxval=bound, dtype=jnp.float32)
    wv = jax.random.uniform(kwv, (D, D), minval=-bound, maxval=bound, dtype=jnp.float32)
    bq = jax.random.uniform(kbq, (D,), minval=-bound, maxval=bound, dtype=jnp.float32)
    bk = jax.random.uniform(kbk, (D,), minval=-bound, maxval=bound, dtype=jnp.float32)
    bv = jax.random.uniform(kbv, (D,), minval=-bound, maxval=bound, dtype=jnp.float32)

    out, attn = simple_attention(query, key_x, value, wq, wk, wv, bq, bk, bv)
    out = jax.block_until_ready(out)
    attn = jax.block_until_ready(attn)

    ref_out, ref_attn = _reference(query, key_x, value, wq, wk, wv, bq, bk, bv)
    assert out.shape == (B, S, D) and attn.shape == (B, S, S)
    # bf16 MXU inputs + EUP approx reciprocal -> compare against the f32 reference
    # with modest tolerances (softmax and all accumulations are f32).
    assert jnp.allclose(out, ref_out, atol=2e-2, rtol=2e-2), \
        float(jnp.max(jnp.abs(out - ref_out)))
    assert jnp.allclose(attn, ref_attn, atol=2e-3, rtol=2e-2), \
        float(jnp.max(jnp.abs(attn - ref_attn)))

    print("KERNEL_OK")
</pallas_src>

<mosaic_0001>
module attributes {stable_mosaic.version = 11 : i64} {
  func.func @_attention_kernel(%arg0: i32, %arg1: memref<160x128xf32, #tpu.memory_space<vmem>>, %arg2: memref<160x128xf32, #tpu.memory_space<vmem>>, %arg3: memref<160x128xf32, #tpu.memory_space<vmem>>, %arg4: memref<128x128xbf16, #tpu.memory_space<vmem>>, %arg5: memref<128x128xbf16, #tpu.memory_space<vmem>>, %arg6: memref<128x128xbf16, #tpu.memory_space<vmem>>, %arg7: memref<1x128xf32, #tpu.memory_space<vmem>>, %arg8: memref<1x128xf32, #tpu.memory_space<vmem>>, %arg9: memref<1x128xf32, #tpu.memory_space<vmem>>, %arg10: memref<160x128xf32, #tpu.memory_space<vmem>>, %arg11: memref<5x32x32xf32, #tpu.memory_space<vmem>>) attributes {dimension_semantics = [#tpu.dimension_semantics<parallel>], iteration_bounds = array<i64: 2>, scalar_prefetch = 0 : i64, scratch_operands = 0 : i64, tpu.core_type = #tpu.core_type<tc>, window_params = [{transform_indices = @transform_0, window_bounds = array<i64: 160, 128>}, {transform_indices = @transform_1, window_bounds = array<i64: 160, 128>}, {transform_indices = @transform_2, window_bounds = array<i64: 160, 128>}, {pipeline_mode = #tpu.pipeline_mode<synchronous>, transform_indices = @transform_3, window_bounds = array<i64: 128, 128>}, {pipeline_mode = #tpu.pipeline_mode<synchronous>, transform_indices = @transform_4, window_bounds = array<i64: 128, 128>}, {pipeline_mode = #tpu.pipeline_mode<synchronous>, transform_indices = @transform_5, window_bounds = array<i64: 128, 128>}, {pipeline_mode = #tpu.pipeline_mode<synchronous>, transform_indices = @transform_6, window_bounds = array<i64: 1, 128>}, {pipeline_mode = #tpu.pipeline_mode<synchronous>, transform_indices = @transform_7, window_bounds = array<i64: 1, 128>}, {pipeline_mode = #tpu.pipeline_mode<synchronous>, transform_indices = @transform_8, window_bounds = array<i64: 1, 128>}, {transform_indices = @transform_9, window_bounds = array<i64: 160, 128>}, {transform_indices = @transform_10, window_bounds = array<i64: 5, 32, 32>}]} {
    %c0 = arith.constant 0 : index
    %c0_0 = arith.constant 0 : index
    %0 = vector.load %arg1[%c0, %c0_0] : memref<160x128xf32, #tpu.memory_space<vmem>>, vector<160x128xf32>
    %1 = arith.truncf %0 : vector<160x128xf32> to vector<160x128xbf16>
    %c0_1 = arith.constant 0 : index
    %c0_2 = arith.constant 0 : index
    %2 = vector.load %arg4[%c0_1, %c0_2] : memref<128x128xbf16, #tpu.memory_space<vmem>>, vector<128x128xbf16>
    %cst = arith.constant dense<0.000000e+00> : vector<160x128xf32>
    %3 = tpu.matmul %1, %2, %cst {dimension_numbers = #tpu.dot_dimension_numbers<[1], [0], [0], [1], [0, 0, 1, 1], [], []>} : vector<160x128xbf16>, vector<128x128xbf16>, vector<160x128xf32> -> vector<160x128xf32>
    %c0_3 = arith.constant 0 : index
    %c0_4 = arith.constant 0 : index
    %4 = vector.load %arg7[%c0_3, %c0_4] : memref<1x128xf32, #tpu.memory_space<vmem>>, vector<1x128xf32>
    %5 = vector.broadcast %4 : vector<1x128xf32> to vector<160x128xf32>
    %6 = arith.addf %3, %5 : vector<160x128xf32>
    %c0_5 = arith.constant 0 : index
    %c0_6 = arith.constant 0 : index
    %7 = vector.load %arg2[%c0_5, %c0_6] : memref<160x128xf32, #tpu.memory_space<vmem>>, vector<160x128xf32>
    %8 = arith.truncf %7 : vector<160x128xf32> to vector<160x128xbf16>
    %c0_7 = arith.constant 0 : index
    %c0_8 = arith.constant 0 : index
    %9 = vector.load %arg5[%c0_7, %c0_8] : memref<128x128xbf16, #tpu.memory_space<vmem>>, vector<128x128xbf16>
    %cst_9 = arith.constant dense<0.000000e+00> : vector<160x128xf32>
    %10 = tpu.matmul %8, %9, %cst_9 {dimension_numbers = #tpu.dot_dimension_numbers<[1], [0], [0], [1], [0, 0, 1, 1], [], []>} : vector<160x128xbf16>, vector<128x128xbf16>, vector<160x128xf32> -> vector<160x128xf32>
    %c0_10 = arith.constant 0 : index
    %c0_11 = arith.constant 0 : index
    %11 = vector.load %arg8[%c0_10, %c0_11] : memref<1x128xf32, #tpu.memory_space<vmem>>, vector<1x128xf32>
    %12 = vector.broadcast %11 : vector<1x128xf32> to vector<160x128xf32>
    %13 = arith.addf %10, %12 : vector<160x128xf32>
    %c0_12 = arith.constant 0 : index
    %c0_13 = arith.constant 0 : index
    %14 = vector.load %arg3[%c0_12, %c0_13] : memref<160x128xf32, #tpu.memory_space<vmem>>, vector<160x128xf32>
    %15 = arith.truncf %14 : vector<160x128xf32> to vector<160x128xbf16>
    %c0_14 = arith.constant 0 : index
    %c0_15 = arith.constant 0 : index
    %16 = vector.load %arg6[%c0_14, %c0_15] : memref<128x128xbf16, #tpu.memory_space<vmem>>, vector<128x128xbf16>
    %cst_16 = arith.constant dense<0.000000e+00> : vector<160x128xf32>
    %17 = tpu.matmul %15, %16, %cst_16 {dimension_numbers = #tpu.dot_dimension_numbers<[1], [0], [0], [1], [0, 0, 1, 1], [], []>} : vector<160x128xbf16>, vector<128x128xbf16>, vector<160x128xf32> -> vector<160x128xf32>
    %c0_17 = arith.constant 0 : index
    %c0_18 = arith.constant 0 : index
    %18 = vector.load %arg9[%c0_17, %c0_18] : memref<1x128xf32, #tpu.memory_space<vmem>>, vector<1x128xf32>
    %19 = vector.broadcast %18 : vector<1x128xf32> to vector<160x128xf32>
    %20 = arith.addf %17, %19 : vector<160x128xf32>
    %21 = arith.truncf %6 : vector<160x128xf32> to vector<160x128xbf16>
    %22 = arith.truncf %13 : vector<160x128xf32> to vector<160x128xbf16>
    %23 = arith.truncf %20 : vector<160x128xf32> to vector<160x128xbf16>
    %24 = vector.extract_strided_slice %21 {offsets = [0, 0], sizes = [32, 128], strides = [1, 1]} : vector<160x128xbf16> to vector<32x128xbf16>
    %25 = vector.extract_strided_slice %22 {offsets = [0, 0], sizes = [32, 128], strides = [1, 1]} : vector<160x128xbf16> to vector<32x128xbf16>
    %26 = vector.extract_strided_slice %23 {offsets = [0, 0], sizes = [32, 128], strides = [1, 1]} : vector<160x128xbf16> to vector<32x128xbf16>
    %cst_19 = arith.constant dense<0.000000e+00> : vector<32x32xf32>
    %27 = tpu.matmul %24, %25, %cst_19 {dimension_numbers = #tpu.dot_dimension_numbers<[1], [1], [0], [0], [0, 0, 1, 0], [], []>} : vector<32x128xbf16>, vector<32x128xbf16>, vector<32x32xf32> -> vector<32x32xf32>
    %cst_20 = arith.constant dense<0xFF800000> : vector<32xf32>
    %28 = vector.multi_reduction <maximumf>, %27, %cst_20 [1] : vector<32x32xf32> to vector<32xf32>
    %29 = vector.shape_cast %28 : vector<32xf32> to vector<32x1xf32>
    %30 = vector.broadcast %29 : vector<32x1xf32> to vector<32x32xf32>
    %31 = arith.subf %27, %30 : vector<32x32xf32>
    %32 = math.exp %31 : vector<32x32xf32>
    %cst_21 = arith.constant dense<0.000000e+00> : vector<32xf32>
    %33 = vector.multi_reduction <add>, %32, %cst_21 [1] : vector<32x32xf32> to vector<32xf32>
    %34 = vector.shape_cast %33 : vector<32xf32> to vector<32x1xf32>
    %35 = tpu.reciprocal %34 {approx = true} : vector<32x1xf32> -> vector<32x1xf32>
    %36 = vector.broadcast %35 : vector<32x1xf32> to vector<32x32xf32>
    %37 = arith.mulf %32, %36 : vector<32x32xf32>
    %38 = arith.truncf %37 : vector<32x32xf32> to vector<32x32xbf16>
    %cst_22 = arith.constant dense<0.000000e+00> : vector<32x128xf32>
    %39 = tpu.matmul %38, %26, %cst_22 {dimension_numbers = #tpu.dot_dimension_numbers<[1], [0], [0], [1], [0, 0, 1, 1], [], []>} : vector<32x32xbf16>, vector<32x128xbf16>, vector<32x128xf32> -> vector<32x128xf32>
    %c0_23 = arith.constant 0 : index
    %c0_24 = arith.constant 0 : index
    %40 = vector.load %arg10[%c0_23, %c0_24] : memref<160x128xf32, #tpu.memory_space<vmem>>, vector<32x128xf32>
    tpu.vector_store %arg10[%c0_23, %c0_24], %39 {strides = array<i32>} : memref<160x128xf32, #tpu.memory_space<vmem>>, vector<32x128xf32>,
    %c0_25 = arith.constant 0 : index
    %c0_26 = arith.constant 0 : index
    %c0_27 = arith.constant 0 : index
    %41 = vector.load %arg11[%c0_25, %c0_26, %c0_27] : memref<5x32x32xf32, #tpu.memory_space<vmem>>, vector<1x32x32xf32>
    %42 = vector.shape_cast %41 : vector<1x32x32xf32> to vector<32x32xf32>
    %43 = vector.shape_cast %37 : vector<32x32xf32> to vector<1x32x32xf32>
    tpu.vector_store %arg11[%c0_25, %c0_26, %c0_27], %43 {strides = array<i32>} : memref<5x32x32xf32, #tpu.memory_space<vmem>>, vector<1x32x32xf32>,
    %44 = vector.extract_strided_slice %21 {offsets = [32, 0], sizes = [32, 128], strides = [1, 1]} : vector<160x128xbf16> to vector<32x128xbf16>
    %45 = vector.extract_strided_slice %22 {offsets = [32, 0], sizes = [32, 128], strides = [1, 1]} : vector<160x128xbf16> to vector<32x128xbf16>
    %46 = vector.extract_strided_slice %23 {offsets = [32, 0], sizes = [32, 128], strides = [1, 1]} : vector<160x128xbf16> to vector<32x128xbf16>
    %cst_28 = arith.constant dense<0.000000e+00> : vector<32x32xf32>
    %47 = tpu.matmul %44, %45, %cst_28 {dimension_numbers = #tpu.dot_dimension_numbers<[1], [1], [0], [0], [0, 0, 1, 0], [], []>} : vector<32x128xbf16>, vector<32x128xbf16>, vector<32x32xf32> -> vector<32x32xf32>
    %cst_29 = arith.constant dense<0xFF800000> : vector<32xf32>
    %48 = vector.multi_reduction <maximumf>, %47, %cst_29 [1] : vector<32x32xf32> to vector<32xf32>
    %49 = vector.shape_cast %48 : vector<32xf32> to vector<32x1xf32>
    %50 = vector.broadcast %49 : vector<32x1xf32> to vector<32x32xf32>
    %51 = arith.subf %47, %50 : vector<32x32xf32>
    %52 = math.exp %51 : vector<32x32xf32>
    %cst_30 = arith.constant dense<0.000000e+00> : vector<32xf32>
    %53 = vector.multi_reduction <add>, %52, %cst_30 [1] : vector<32x32xf32> to vector<32xf32>
    %54 = vector.shape_cast %53 : vector<32xf32> to vector<32x1xf32>
    %55 = tpu.reciprocal %54 {approx = true} : vector<32x1xf32> -> vector<32x1xf32>
    %56 = vector.broadcast %55 : vector<32x1xf32> to vector<32x32xf32>
    %57 = arith.mulf %52, %56 : vector<32x32xf32>
    %58 = arith.truncf %57 : vector<32x32xf32> to vector<32x32xbf16>
    %cst_31 = arith.constant dense<0.000000e+00> : vector<32x128xf32>
    %59 = tpu.matmul %58, %46, %cst_31 {dimension_numbers = #tpu.dot_dimension_numbers<[1], [0], [0], [1], [0, 0, 1, 1], [], []>} : vector<32x32xbf16>, vector<32x128xbf16>, vector<32x128xf32> -> vector<32x128xf32>
    %c32 = arith.constant 32 : index
    %c0_32 = arith.constant 0 : index
    %60 = vector.load %arg10[%c32, %c0_32] : memref<160x128xf32, #tpu.memory_space<vmem>>, vector<32x128xf32>
    tpu.vector_store %arg10[%c32, %c0_32], %59 {strides = array<i32>} : memref<160x128xf32, #tpu.memory_space<vmem>>, vector<32x128xf32>,
    %c1 = arith.constant 1 : index
    %c0_33 = arith.constant 0 : index
    %c0_34 = arith.constant 0 : index
    %61 = vector.load %arg11[%c1, %c0_33, %c0_34] : memref<5x32x32xf32, #tpu.memory_space<vmem>>, vector<1x32x32xf32>
    %62 = vector.shape_cast %61 : vector<1x32x32xf32> to vector<32x32xf32>
    %63 = vector.shape_cast %57 : vector<32x32xf32> to vector<1x32x32xf32>
    tpu.vector_store %arg11[%c1, %c0_33, %c0_34], %63 {strides = array<i32>} : memref<5x32x32xf32, #tpu.memory_space<vmem>>, vector<1x32x32xf32>,
    %64 = vector.extract_strided_slice %21 {offsets = [64, 0], sizes = [32, 128], strides = [1, 1]} : vector<160x128xbf16> to vector<32x128xbf16>
    %65 = vector.extract_strided_slice %22 {offsets = [64, 0], sizes = [32, 128], strides = [1, 1]} : vector<160x128xbf16> to vector<32x128xbf16>
    %66 = vector.extract_strided_slice %23 {offsets = [64, 0], sizes = [32, 128], strides = [1, 1]} : vector<160x128xbf16> to vector<32x128xbf16>
    %cst_35 = arith.constant dense<0.000000e+00> : vector<32x32xf32>
    %67 = tpu.matmul %64, %65, %cst_35 {dimension_numbers = #tpu.dot_dimension_numbers<[1], [1], [0], [0], [0, 0, 1, 0], [], []>} : vector<32x128xbf16>, vector<32x128xbf16>, vector<32x32xf32> -> vector<32x32xf32>
    %cst_36 = arith.constant dense<0xFF800000> : vector<32xf32>
    %68 = vector.multi_reduction <maximumf>, %67, %cst_36 [1] : vector<32x32xf32> to vector<32xf32>
    %69 = vector.shape_cast %68 : vector<32xf32> to vector<32x1xf32>
    %70 = vector.broadcast %69 : vector<32x1xf32> to vector<32x32xf32>
    %71 = arith.subf %67, %70 : vector<32x32xf32>
    %72 = math.exp %71 : vector<32x32xf32>
    %cst_37 = arith.constant dense<0.000000e+00> : vector<32xf32>
    %73 = vector.multi_reduction <add>, %72, %cst_37 [1] : vector<32x32xf32> to vector<32xf32>
    %74 = vector.shape_cast %73 : vector<32xf32> to vector<32x1xf32>
    %75 = tpu.reciprocal %74 {approx = true} : vector<32x1xf32> -> vector<32x1xf32>
    %76 = vector.broadcast %75 : vector<32x1xf32> to vector<32x32xf32>
    %77 = arith.mulf %72, %76 : vector<32x32xf32>
    %78 = arith.truncf %77 : vector<32x32xf32> to vector<32x32xbf16>
    %cst_38 = arith.constant dense<0.000000e+00> : vector<32x128xf32>
    %79 = tpu.matmul %78, %66, %cst_38 {dimension_numbers = #tpu.dot_dimension_numbers<[1], [0], [0], [1], [0, 0, 1, 1], [], []>} : vector<32x32xbf16>, vector<32x128xbf16>, vector<32x128xf32> -> vector<32x128xf32>
    %c64 = arith.constant 64 : index
    %c0_39 = arith.constant 0 : index
    %80 = vector.load %arg10[%c64, %c0_39] : memref<160x128xf32, #tpu.memory_space<vmem>>, vector<32x128xf32>
    tpu.vector_store %arg10[%c64, %c0_39], %79 {strides = array<i32>} : memref<160x128xf32, #tpu.memory_space<vmem>>, vector<32x128xf32>,
    %c2 = arith.constant 2 : index
    %c0_40 = arith.constant 0 : index
    %c0_41 = arith.constant 0 : index
    %81 = vector.load %arg11[%c2, %c0_40, %c0_41] : memref<5x32x32xf32, #tpu.memory_space<vmem>>, vector<1x32x32xf32>
    %82 = vector.shape_cast %81 : vector<1x32x32xf32> to vector<32x32xf32>
    %83 = vector.shape_cast %77 : vector<32x32xf32> to vector<1x32x32xf32>
    tpu.vector_store %arg11[%c2, %c0_40, %c0_41], %83 {strides = array<i32>} : memref<5x32x32xf32, #tpu.memory_space<vmem>>, vector<1x32x32xf32>,
    %84 = vector.extract_strided_slice %21 {offsets = [96, 0], sizes = [32, 128], strides = [1, 1]} : vector<160x128xbf16> to vector<32x128xbf16>
    %85 = vector.extract_strided_slice %22 {offsets = [96, 0], sizes = [32, 128], strides = [1, 1]} : vector<160x128xbf16> to vector<32x128xbf16>
    %86 = vector.extract_strided_slice %23 {offsets = [96, 0], sizes = [32, 128], strides = [1, 1]} : vector<160x128xbf16> to vector<32x128xbf16>
    %cst_42 = arith.constant dense<0.000000e+00> : vector<32x32xf32>
    %87 = tpu.matmul %84, %85, %cst_42 {dimension_numbers = #tpu.dot_dimension_numbers<[1], [1], [0], [0], [0, 0, 1, 0], [], []>} : vector<32x128xbf16>, vector<32x128xbf16>, vector<32x32xf32> -> vector<32x32xf32>
    %cst_43 = arith.constant dense<0xFF800000> : vector<32xf32>
    %88 = vector.multi_reduction <maximumf>, %87, %cst_43 [1] : vector<32x32xf32> to vector<32xf32>
    %89 = vector.shape_cast %88 : vector<32xf32> to vector<32x1xf32>
    %90 = vector.broadcast %89 : vector<32x1xf32> to vector<32x32xf32>
    %91 = arith.subf %87, %90 : vector<32x32xf32>
    %92 = math.exp %91 : vector<32x32xf32>
    %cst_44 = arith.constant dense<0.000000e+00> : vector<32xf32>
    %93 = vector.multi_reduction <add>, %92, %cst_44 [1] : vector<32x32xf32> to vector<32xf32>
    %94 = vector.shape_cast %93 : vector<32xf32> to vector<32x1xf32>
    %95 = tpu.reciprocal %94 {approx = true} : vector<32x1xf32> -> vector<32x1xf32>
    %96 = vector.broadcast %95 : vector<32x1xf32> to vector<32x32xf32>
    %97 = arith.mulf %92, %96 : vector<32x32xf32>
    %98 = arith.truncf %97 : vector<32x32xf32> to vector<32x32xbf16>
    %cst_45 = arith.constant dense<0.000000e+00> : vector<32x128xf32>
    %99 = tpu.matmul %98, %86, %cst_45 {dimension_numbers = #tpu.dot_dimension_numbers<[1], [0], [0], [1], [0, 0, 1, 1], [], []>} : vector<32x32xbf16>, vector<32x128xbf16>, vector<32x128xf32> -> vector<32x128xf32>
    %c96 = arith.constant 96 : index
    %c0_46 = arith.constant 0 : index
    %100 = vector.load %arg10[%c96, %c0_46] : memref<160x128xf32, #tpu.memory_space<vmem>>, vector<32x128xf32>
    tpu.vector_store %arg10[%c96, %c0_46], %99 {strides = array<i32>} : memref<160x128xf32, #tpu.memory_space<vmem>>, vector<32x128xf32>,
    %c3 = arith.constant 3 : index
    %c0_47 = arith.constant 0 : index
    %c0_48 = arith.constant 0 : index
    %101 = vector.load %arg11[%c3, %c0_47, %c0_48] : memref<5x32x32xf32, #tpu.memory_space<vmem>>, vector<1x32x32xf32>
    %102 = vector.shape_cast %101 : vector<1x32x32xf32> to vector<32x32xf32>
    %103 = vector.shape_cast %97 : vector<32x32xf32> to vector<1x32x32xf32>
    tpu.vector_store %arg11[%c3, %c0_47, %c0_48], %103 {strides = array<i32>} : memref<5x32x32xf32, #tpu.memory_space<vmem>>, vector<1x32x32xf32>,
    %104 = vector.extract_strided_slice %21 {offsets = [128, 0], sizes = [32, 128], strides = [1, 1]} : vector<160x128xbf16> to vector<32x128xbf16>
    %105 = vector.extract_strided_slice %22 {offsets = [128, 0], sizes = [32, 128], strides = [1, 1]} : vector<160x128xbf16> to vector<32x128xbf16>
    %106 = vector.extract_strided_slice %23 {offsets = [128, 0], sizes = [32, 128], strides = [1, 1]} : vector<160x128xbf16> to vector<32x128xbf16>
    %cst_49 = arith.constant dense<0.000000e+00> : vector<32x32xf32>
    %107 = tpu.matmul %104, %105, %cst_49 {dimension_numbers = #tpu.dot_dimension_numbers<[1], [1], [0], [0], [0, 0, 1, 0], [], []>} : vector<32x128xbf16>, vector<32x128xbf16>, vector<32x32xf32> -> vector<32x32xf32>
    %cst_50 = arith.constant dense<0xFF800000> : vector<32xf32>
    %108 = vector.multi_reduction <maximumf>, %107, %cst_50 [1] : vector<32x32xf32> to vector<32xf32>
    %109 = vector.shape_cast %108 : vector<32xf32> to vector<32x1xf32>
    %110 = vector.broadcast %109 : vector<32x1xf32> to vector<32x32xf32>
    %111 = arith.subf %107, %110 : vector<32x32xf32>
    %112 = math.exp %111 : vector<32x32xf32>
    %cst_51 = arith.constant dense<0.000000e+00> : vector<32xf32>
    %113 = vector.multi_reduction <add>, %112, %cst_51 [1] : vector<32x32xf32> to vector<32xf32>
    %114 = vector.shape_cast %113 : vector<32xf32> to vector<32x1xf32>
    %115 = tpu.reciprocal %114 {approx = true} : vector<32x1xf32> -> vector<32x1xf32>
    %116 = vector.broadcast %115 : vector<32x1xf32> to vector<32x32xf32>
    %117 = arith.mulf %112, %116 : vector<32x32xf32>
    %118 = arith.truncf %117 : vector<32x32xf32> to vector<32x32xbf16>
    %cst_52 = arith.constant dense<0.000000e+00> : vector<32x128xf32>
    %119 = tpu.matmul %118, %106, %cst_52 {dimension_numbers = #tpu.dot_dimension_numbers<[1], [0], [0], [1], [0, 0, 1, 1], [], []>} : vector<32x32xbf16>, vector<32x128xbf16>, vector<32x128xf32> -> vector<32x128xf32>
    %c128 = arith.constant 128 : index
    %c0_53 = arith.constant 0 : index
    %120 = vector.load %arg10[%c128, %c0_53] : memref<160x128xf32, #tpu.memory_space<vmem>>, vector<32x128xf32>
    tpu.vector_store %arg10[%c128, %c0_53], %119 {strides = array<i32>} : memref<160x128xf32, #tpu.memory_space<vmem>>, vector<32x128xf32>,
    %c4 = arith.constant 4 : index
    %c0_54 = arith.constant 0 : index
    %c0_55 = arith.constant 0 : index
    %121 = vector.load %arg11[%c4, %c0_54, %c0_55] : memref<5x32x32xf32, #tpu.memory_space<vmem>>, vector<1x32x32xf32>
    %122 = vector.shape_cast %121 : vector<1x32x32xf32> to vector<32x32xf32>
    %123 = vector.shape_cast %117 : vector<32x32xf32> to vector<1x32x32xf32>
    tpu.vector_store %arg11[%c4, %c0_54, %c0_55], %123 {strides = array<i32>} : memref<5x32x32xf32, #tpu.memory_space<vmem>>, vector<1x32x32xf32>,
    return
  }
  func.func @transform_0(%arg0: i32) -> (i32, i32) {
    %c0_i32 = arith.constant 0 : i32
    %c0_i32_0 = arith.constant 0 : i32
    return %arg0, %c0_i32 : i32, i32
  }
  func.func @transform_1(%arg0: i32) -> (i32, i32) {
    %c0_i32 = arith.constant 0 : i32
    %c0_i32_0 = arith.constant 0 : i32
    return %arg0, %c0_i32 : i32, i32
  }
  func.func @transform_2(%arg0: i32) -> (i32, i32) {
    %c0_i32 = arith.constant 0 : i32
    %c0_i32_0 = arith.constant 0 : i32
    return %arg0, %c0_i32 : i32, i32
  }
  func.func @transform_3(%arg0: i32) -> (i32, i32) {
    %c0_i32 = arith.constant 0 : i32
    %c0_i32_0 = arith.constant 0 : i32
    %c0_i32_1 = arith.constant 0 : i32
    return %c0_i32, %c0_i32_0 : i32, i32
  }
  func.func @transform_4(%arg0: i32) -> (i32, i32) {
    %c0_i32 = arith.constant 0 : i32
    %c0_i32_0 = arith.constant 0 : i32
    %c0_i32_1 = arith.constant 0 : i32
    return %c0_i32, %c0_i32_0 : i32, i32
  }
  func.func @transform_5(%arg0: i32) -> (i32, i32) {
    %c0_i32 = arith.constant 0 : i32
    %c0_i32_0 = arith.constant 0 : i32
    %c0_i32_1 = arith.constant 0 : i32
    return %c0_i32, %c0_i32_0 : i32, i32
  }
  func.func @transform_6(%arg0: i32) -> (i32, i32) {
    %c0_i32 = arith.constant 0 : i32
    %c0_i32_0 = arith.constant 0 : i32
    %c0_i32_1 = arith.constant 0 : i32
    return %c0_i32, %c0_i32_0 : i32, i32
  }
  func.func @transform_7(%arg0: i32) -> (i32, i32) {
    %c0_i32 = arith.constant 0 : i32
    %c0_i32_0 = arith.constant 0 : i32
    %c0_i32_1 = arith.constant 0 : i32
    return %c0_i32, %c0_i32_0 : i32, i32
  }
  func.func @transform_8(%arg0: i32) -> (i32, i32) {
    %c0_i32 = arith.constant 0 : i32
    %c0_i32_0 = arith.constant 0 : i32
    %c0_i32_1 = arith.constant 0 : i32
    return %c0_i32, %c0_i32_0 : i32, i32
  }
  func.func @transform_9(%arg0: i32) -> (i32, i32) {
    %c0_i32 = arith.constant 0 : i32
    %c0_i32_0 = arith.constant 0 : i32
    return %arg0, %c0_i32 : i32, i32
  }
  func.func @transform_10(%arg0: i32) -> (i32, i32, i32) {
    %c0_i32 = arith.constant 0 : i32
    %c0_i32_0 = arith.constant 0 : i32
    %c0_i32_1 = arith.constant 0 : i32
    return %arg0, %c0_i32, %c0_i32_0 : i32, i32, i32
  }
}

</mosaic_0001>

<llo_original>
// kernel: tpu_custom_call.1
$region0: #{tpu_custom_call.1}
  #allocation0 [shape = 'u32[]', space=smem, size = 0x4, offset = 0x4, fixed_abs, tag = 'smem constant byte address 0x4 - core index']
  #allocation1 [shape = 'u32[144,128]{1,0:T(1,128)}', space=vmem, size = 0x12000, scoped, tag = 'internal scratch']
  %s0 = inlined_call_operand.hbm [shape: f32[320,128], index: 0, kind: input, shape index: {}]
  %s1 = inlined_call_operand.hbm [shape: f32[320,128], index: 1, kind: input, shape index: {}]
  %s2 = inlined_call_operand.hbm [shape: f32[320,128], index: 2, kind: input, shape index: {}]
  %s3 = inlined_call_operand.hbm [shape: bf16[128,128], index: 3, kind: input, shape index: {}]
  %s4 = inlined_call_operand.hbm [shape: bf16[128,128], index: 4, kind: input, shape index: {}]
  %s5 = inlined_call_operand.hbm [shape: bf16[128,128], index: 5, kind: input, shape index: {}]
  %s6 = inlined_call_operand.vmem [shape: f32[1,128], index: 6, kind: input, shape index: {}]
  %s7 = inlined_call_operand.vmem [shape: f32[1,128], index: 7, kind: input, shape index: {}]
  %s8 = inlined_call_operand.vmem [shape: f32[1,128], index: 8, kind: input, shape index: {}]
  %s9 = inlined_call_operand.hbm [shape: f32[320,128], index: 9, kind: output, shape index: {0}]
  %s10 = inlined_call_operand.hbm [shape: f32[10,32,32], index: 10, kind: output, shape index: {1}]
  %11 = xla_tuple %s9, %s10
  %s12 = sld [smem:[#allocation0]]
  $region101: #{tpu_custom_call.1} parent=0
    _
  %s14 = ssub.s32 1, %s12
  %s15 = scalar_select 0, %s14, %s12
  $region1: #{tpu_custom_call.1} parent=0
    #allocation2 [shape = 'u8[163840]{0}', space=vmem, size = 0x28000, scoped, tag = 'input window, operand 0']
    #allocation3 [shape = 's32[2]{0}', space=sflag, size = 0x8, scoped, tag = 'scoped memory for tpu_custom_call.1']
    #allocation4 [shape = 's32[2]{0}', space=sflag, size = 0x8, scoped, tag = 'scoped memory for tpu_custom_call.1']
    #allocation5 [shape = 'u8[163840]{0}', space=vmem, size = 0x28000, scoped, tag = 'input window, operand 1']
    #allocation6 [shape = 's32[2]{0}', space=sflag, size = 0x8, scoped, tag = 'scoped memory for tpu_custom_call.1']
    #allocation7 [shape = 'u8[163840]{0}', space=vmem, size = 0x28000, scoped, tag = 'input window, operand 2']
    #allocation8 [shape = 'u8[32768]{0}', space=vmem, size = 0x8000, scoped, tag = 'input window, operand 3, single buffered']
    #allocation9 [shape = 's32[1]{0}', space=sflag, size = 0x4, scoped, tag = 'scoped memory for tpu_custom_call.1']
    #allocation10 [shape = 'u8[32768]{0}', space=vmem, size = 0x8000, scoped, tag = 'input window, operand 4, single buffered']
    #allocation11 [shape = 'u8[32768]{0}', space=vmem, size = 0x8000, scoped, tag = 'input window, operand 5, single buffered']
    #allocation12 [shape = 's32[1]{0}', space=sflag, size = 0x4, scoped, tag = 'scoped memory for tpu_custom_call.1']
    #allocation13 [shape = 'u8[163840]{0}', space=vmem, size = 0x28000, scoped, tag = 'output window, operand 0']
    #allocation14 [shape = 'u8[163840]{0}', space=vmem, size = 0x28000, scoped, tag = 'output window, operand 1']
    #allocation15 [shape = 's32[2]{0}', space=sflag, size = 0x8, scoped, tag = 'scoped memory for tpu_custom_call.1']
    %16 = vsyncpa [#allocation3], 0
    %s17 = scalar_lea.sflag [#allocation3], 1
    %18 = vsyncpa %s17, 0
    %19 = vsyncpa [#allocation6], 0
    %s20 = scalar_lea.sflag [#allocation6], 1
    %21 = vsyncpa %s20, 0
    %22 = vsyncpa [#allocation9], 0
    %23 = vsyncpa [#allocation12], 0
    %24 = vsyncpa [#allocation4], 0
    %s25 = scalar_lea.sflag [#allocation4], 1
    %26 = vsyncpa %s25, 0
    %27 = vsyncpa [#allocation15], 0
    %s28 = scalar_lea.sflag [#allocation15], 1
    %29 = vsyncpa %s28, 0
    loop: start=0, step=1, limit=4
    $region2: #{tpu_custom_call.1} parent=1 // loop_pre_header
      _
    $region3: #{tpu_custom_call.1} parent=1 // loop_header
      %s31 = sphi 0, %s35
      %p32 = scmp.ge.s32.totalorder %s31, 4
      %s41 = sphi 0, %s43
      %s44 = sphi 0, %s41
      %s45 = sphi 0, %s44
      %s61 = sphi 0, %s45
      %s67 = sphi 0, %s69
      %s70 = sphi 0, %s67
      %s71 = sphi 0, %s70
      %s87 = sphi 0, %s71
      %s93 = sphi 0, %s95
      %s96 = sphi 0, %s93
      %s97 = sphi 0, %s96
      %s113 = sphi 0, %s97
      %s117 = sphi 0, %s117
      %s119 = sphi 0, %s117
      %s120 = sphi 0, %s119
      %s134 = sphi 0, %s120
      %s138 = sphi 0, %s138
      %s140 = sphi 0, %s138
      %s141 = sphi 0, %s140
      %s155 = sphi 0, %s141
      %s159 = sphi 0, %s159
      %s161 = sphi 0, %s159
      %s162 = sphi 0, %s161
      %s176 = sphi 0, %s162
      %s180 = sphi 0, %s180
      %s182 = sphi 0, %s180
      %s183 = sphi 0, %s182
      %s197 = sphi 0, %s183
      %s201 = sphi 0, %s201
      %s203 = sphi 0, %s201
      %s204 = sphi 0, %s203
      %s218 = sphi 0, %s204
      %s222 = sphi 0, %s222
      %s224 = sphi 0, %s222
      %s225 = sphi 0, %s224
      %s239 = sphi 0, %s225
      %s245 = sphi 0, %s247
      %s248 = sphi 0, %s245
      %s249 = sphi 0, %s248
      %s265 = sphi 0, %s249
      %s271 = sphi 0, %s273
      %s274 = sphi 0, %s271
      %s275 = sphi 0, %s274
      %s291 = sphi 0, %s275
    $region4: #{tpu_custom_call.1} parent=1 // loop_header_branch
      %34 = sbr.rel (%p32) target = $region8
    $region5: #{tpu_custom_call.1} parent=1 // loop_body
      %s36 = ssub.s32 %s31, 1
      %s37 = ssub.s32 %s31, 2
      %s38 = sadd.s32 %s31, 1
      %s39 = ssub.s32 %s31, %s38
      %p40 = scmp.eq.s32.totalorder %s39, 0
      %s42 = sadd.s32 %s41, 1
      %s43 = scalar_select %p40, %s41, %s42
      %p46 = pneg %p40
      %p47 = scmp.eq.s32.totalorder %s31, 1
      %p48 = por %p46, %p47
      %p49 = scmp.ne.s32.totalorder %s41, %s44
      %p50 = scmp.eq.s32.totalorder %s31, 0
      %p51 = por %p49, %p50
      %p52 = scmp.ne.s32.totalorder %s41, %s44
      %p53 = scmp.eq.s32.totalorder %s36, 1
      %p54 = por %p52, %p53
      %p55 = scmp.ne.s32.totalorder %s44, %s45
      %p56 = scmp.eq.s32.totalorder %s36, 0
      %p57 = por %p55, %p56
      %p58 = scmp.ne.s32.totalorder %s44, %s45
      %p59 = scmp.eq.s32.totalorder %s37, 1
      %p60 = por %p58, %p59
      %p62 = scmp.ne.s32.totalorder %s45, %s61
      %p63 = scmp.eq.s32.totalorder %s37, 0
      %p64 = por %p62, %p63
      %s65 = ssub.s32 %s31, %s38
      %p66 = scmp.eq.s32.totalorder %s65, 0
      %s68 = sadd.s32 %s67, 1
      %s69 = scalar_select %p66, %s67, %s68
      %p72 = pneg %p66
      %p73 = scmp.eq.s32.totalorder %s31, 1
      %p74 = por %p72, %p73
      %p75 = scmp.ne.s32.totalorder %s67, %s70
      %p76 = scmp.eq.s32.totalorder %s31, 0
      %p77 = por %p75, %p76
      %p78 = scmp.ne.s32.totalorder %s67, %s70
      %p79 = scmp.eq.s32.totalorder %s36, 1
      %p80 = por %p78, %p79
      %p81 = scmp.ne.s32.totalorder %s70, %s71
      %p82 = scmp.eq.s32.totalorder %s36, 0
      %p83 = por %p81, %p82
      %p84 = scmp.ne.s32.totalorder %s70, %s71
      %p85 = scmp.eq.s32.totalorder %s37, 1
      %p86 = por %p84, %p85
      %p88 = scmp.ne.s32.totalorder %s71, %s87
      %p89 = scmp.eq.s32.totalorder %s37, 0
      %p90 = por %p88, %p89
      %s91 = ssub.s32 %s31, %s38
      %p92 = scmp.eq.s32.totalorder %s91, 0
      %s94 = sadd.s32 %s93, 1
      %s95 = scalar_select %p92, %s93, %s94
      %p98 = pneg %p92
      %p99 = scmp.eq.s32.totalorder %s31, 1
      %p100 = por %p98, %p99
      %p101 = scmp.ne.s32.totalorder %s93, %s96
      %p102 = scmp.eq.s32.totalorder %s31, 0
      %p103 = por %p101, %p102
      %p104 = scmp.ne.s32.totalorder %s93, %s96
      %p105 = scmp.eq.s32.totalorder %s36, 1
      %p106 = por %p104, %p105
      %p107 = scmp.ne.s32.totalorder %s96, %s97
      %p108 = scmp.eq.s32.totalorder %s36, 0
      %p109 = por %p107, %p108
      %p110 = scmp.ne.s32.totalorder %s96, %s97
      %p111 = scmp.eq.s32.totalorder %s37, 1
      %p112 = por %p110, %p111
      %p114 = scmp.ne.s32.totalorder %s97, %s113
      %p115 = scmp.eq.s32.totalorder %s37, 0
      %p116 = por %p114, %p115
      %s118 = sadd.s32 %s117, 1
      %p121 = scmp.eq.s32.totalorder %s31, 1
      %p122 = scmp.ne.s32.totalorder %s117, %s119
      %p123 = scmp.eq.s32.totalorder %s31, 0
      %p124 = por %p122, %p123
      %p125 = scmp.ne.s32.totalorder %s117, %s119
      %p126 = scmp.eq.s32.totalorder %s36, 1
      %p127 = por %p125, %p126
      %p128 = scmp.ne.s32.totalorder %s119, %s120
      %p129 = scmp.eq.s32.totalorder %s36, 0
      %p130 = por %p128, %p129
      %p131 = scmp.ne.s32.totalorder %s119, %s120
      %p132 = scmp.eq.s32.totalorder %s37, 1
      %p133 = por %p131, %p132
      %p135 = scmp.ne.s32.totalorder %s120, %s134
      %p136 = scmp.eq.s32.totalorder %s37, 0
      %p137 = por %p135, %p136
      %s139 = sadd.s32 %s138, 1
      %p142 = scmp.eq.s32.totalorder %s31, 1
      %p143 = scmp.ne.s32.totalorder %s138, %s140
      %p144 = scmp.eq.s32.totalorder %s31, 0
      %p145 = por %p143, %p144
      %p146 = scmp.ne.s32.totalorder %s138, %s140
      %p147 = scmp.eq.s32.totalorder %s36, 1
      %p148 = por %p146, %p147
      %p149 = scmp.ne.s32.totalorder %s140, %s141
      %p150 = scmp.eq.s32.totalorder %s36, 0
      %p151 = por %p149, %p150
      %p152 = scmp.ne.s32.totalorder %s140, %s141
      %p153 = scmp.eq.s32.totalorder %s37, 1
      %p154 = por %p152, %p153
      %p156 = scmp.ne.s32.totalorder %s141, %s155
      %p157 = scmp.eq.s32.totalorder %s37, 0
      %p158 = por %p156, %p157
      %s160 = sadd.s32 %s159, 1
      %p163 = scmp.eq.s32.totalorder %s31, 1
      %p164 = scmp.ne.s32.totalorder %s159, %s161
      %p165 = scmp.eq.s32.totalorder %s31, 0
      %p166 = por %p164, %p165
      %p167 = scmp.ne.s32.totalorder %s159, %s161
      %p168 = scmp.eq.s32.totalorder %s36, 1
      %p169 = por %p167, %p168
      %p170 = scmp.ne.s32.totalorder %s161, %s162
      %p171 = scmp.eq.s32.totalorder %s36, 0
      %p172 = por %p170, %p171
      %p173 = scmp.ne.s32.totalorder %s161, %s162
      %p174 = scmp.eq.s32.totalorder %s37, 1
      %p175 = por %p173, %p174
      %p177 = scmp.ne.s32.totalorder %s162, %s176
      %p178 = scmp.eq.s32.totalorder %s37, 0
      %p179 = por %p177, %p178
      %s181 = sadd.s32 %s180, 1
      %p184 = scmp.eq.s32.totalorder %s31, 1
      %p185 = scmp.ne.s32.totalorder %s180, %s182
      %p186 = scmp.eq.s32.totalorder %s31, 0
      %p187 = por %p185, %p186
      %p188 = scmp.ne.s32.totalorder %s180, %s182
      %p189 = scmp.eq.s32.totalorder %s36, 1
      %p190 = por %p188, %p189
      %p191 = scmp.ne.s32.totalorder %s182, %s183
      %p192 = scmp.eq.s32.totalorder %s36, 0
      %p193 = por %p191, %p192
      %p194 = scmp.ne.s32.totalorder %s182, %s183
      %p195 = scmp.eq.s32.totalorder %s37, 1
      %p196 = por %p194, %p195
      %p198 = scmp.ne.s32.totalorder %s183, %s197
      %p199 = scmp.eq.s32.totalorder %s37, 0
      %p200 = por %p198, %p199
      %s202 = sadd.s32 %s201, 1
      %p205 = scmp.eq.s32.totalorder %s31, 1
      %p206 = scmp.ne.s32.totalorder %s201, %s203
      %p207 = scmp.eq.s32.totalorder %s31, 0
      %p208 = por %p206, %p207
      %p209 = scmp.ne.s32.totalorder %s201, %s203
      %p210 = scmp.eq.s32.totalorder %s36, 1
      %p211 = por %p209, %p210
      %p212 = scmp.ne.s32.totalorder %s203, %s204
      %p213 = scmp.eq.s32.totalorder %s36, 0
      %p214 = por %p212, %p213
      %p215 = scmp.ne.s32.totalorder %s203, %s204
      %p216 = scmp.eq.s32.totalorder %s37, 1
      %p217 = por %p215, %p216
      %p219 = scmp.ne.s32.totalorder %s204, %s218
      %p220 = scmp.eq.s32.totalorder %s37, 0
      %p221 = por %p219, %p220
      %s223 = sadd.s32 %s222, 1
      %p226 = scmp.eq.s32.totalorder %s31, 1
      %p227 = scmp.ne.s32.totalorder %s222, %s224
      %p228 = scmp.eq.s32.totalorder %s31, 0
      %p229 = por %p227, %p228
      %p230 = scmp.ne.s32.totalorder %s222, %s224
      %p231 = scmp.eq.s32.totalorder %s36, 1
      %p232 = por %p230, %p231
      %p233 = scmp.ne.s32.totalorder %s224, %s225
      %p234 = scmp.eq.s32.totalorder %s36, 0
      %p235 = por %p233, %p234
      %p236 = scmp.ne.s32.totalorder %s224, %s225
      %p237 = scmp.eq.s32.totalorder %s37, 1
      %p238 = por %p236, %p237
      %p240 = scmp.ne.s32.totalorder %s225, %s239
      %p241 = scmp.eq.s32.totalorder %s37, 0
      %p242 = por %p240, %p241
      %s243 = ssub.s32 %s31, %s38
      %p244 = scmp.eq.s32.totalorder %s243, 0
      %s246 = sadd.s32 %s245, 1
      %s247 = scalar_select %p244, %s245, %s246
      %p250 = pneg %p244
      %p251 = scmp.eq.s32.totalorder %s31, 1
      %p252 = por %p250, %p251
      %p253 = scmp.ne.s32.totalorder %s245, %s248
      %p254 = scmp.eq.s32.totalorder %s31, 0
      %p255 = por %p253, %p254
      %p256 = scmp.ne.s32.totalorder %s245, %s248
      %p257 = scmp.eq.s32.totalorder %s36, 1
      %p258 = por %p256, %p257
      %p259 = scmp.ne.s32.totalorder %s248, %s249
      %p260 = scmp.eq.s32.totalorder %s36, 0
      %p261 = por %p259, %p260
      %p262 = scmp.ne.s32.totalorder %s248, %s249
      %p263 = scmp.eq.s32.totalorder %s37, 1
      %p264 = por %p262, %p263
      %p266 = scmp.ne.s32.totalorder %s249, %s265
      %p267 = scmp.eq.s32.totalorder %s37, 0
      %p268 = por %p266, %p267
      %s269 = ssub.s32 %s31, %s38
      %p270 = scmp.eq.s32.totalorder %s269, 0
      %s272 = sadd.s32 %s271, 1
      %s273 = scalar_select %p270, %s271, %s272
      %p276 = pneg %p270
      %p277 = scmp.eq.s32.totalorder %s31, 1
      %p278 = por %p276, %p277
      %p279 = scmp.ne.s32.totalorder %s271, %s274
      %p280 = scmp.eq.s32.totalorder %s31, 0
      %p281 = por %p279, %p280
      %p282 = scmp.ne.s32.totalorder %s271, %s274
      %p283 = scmp.eq.s32.totalorder %s36, 1
      %p284 = por %p282, %p283
      %p285 = scmp.ne.s32.totalorder %s274, %s275
      %p286 = scmp.eq.s32.totalorder %s36, 0
      %p287 = por %p285, %p286
      %p288 = scmp.ne.s32.totalorder %s274, %s275
      %p289 = scmp.eq.s32.totalorder %s37, 1
      %p290 = por %p288, %p289
      %p292 = scmp.ne.s32.totalorder %s275, %s291
      %p293 = scmp.eq.s32.totalorder %s37, 0
      %p294 = por %p292, %p293
      %p295 = scmp.le.s32.totalorder 1, %s31
      %p296 = scmp.lt.s32.totalorder %s31, 3
      %p297 = pnand %p295, %p296
      %p298 = pneg %p297
      // Predicated region
      $region9: #{tpu_custom_call.1} parent=5 // pred_check
        _
      $region10: #{tpu_custom_call.1} parent=5 // pred_check_branch
        %300 = sbr.rel (%p297) target = $region12
      $region11: #{tpu_custom_call.1} parent=5 // pred_region
        %s301 = ssub.s32 %s31, 1
        // Predicated region
        $region13: #{tpu_custom_call.1} parent=11 // pred_check
          %p302 = pneg %p130
        $region14: #{tpu_custom_call.1} parent=11 // pred_check_branch
          %304 = sbr.rel (%p302) target = $region16
        $region15: #{tpu_custom_call.1} parent=11 // pred_region
          %s306 = ssub.s32 1024, 1024
          %307 = vsyncadd [#allocation9], %s306
          %s308 = sshll.u32 [#allocation8], 4
          %s309 = int_to_ptr.vmem [resolvable:$true] %s308
          %314 = dma.hbm_to_vmem [thread:$0]  %s3, 1024, %s309, [#allocation9], 64, 64, 4
        $region16: #{tpu_custom_call.1} parent=11 // pred_fallthru
          _
        // Predicated region
        $region17: #{tpu_custom_call.1} parent=11 // pred_check
          %p315 = pneg %p151
        $region18: #{tpu_custom_call.1} parent=11 // pred_check_branch
          %317 = sbr.rel (%p315) target = $region20
        $region19: #{tpu_custom_call.1} parent=11 // pred_region
          %s319 = ssub.s32 1024, 1024
          %320 = vsyncadd [#allocation9], %s319
          %s321 = sshll.u32 [#allocation10], 4
          %s322 = int_to_ptr.vmem [resolvable:$true] %s321
          %327 = dma.hbm_to_vmem [thread:$0]  %s4, 1024, %s322, [#allocation9], 64, 64, 4
        $region20: #{tpu_custom_call.1} parent=11 // pred_fallthru
          _
        // Predicated region
        $region21: #{tpu_custom_call.1} parent=11 // pred_check
          %p328 = pneg %p172
        $region22: #{tpu_custom_call.1} parent=11 // pred_check_branch
          %330 = sbr.rel (%p328) target = $region24
        $region23: #{tpu_custom_call.1} parent=11 // pred_region
          %s332 = ssub.s32 1024, 1024
          %333 = vsyncadd [#allocation12], %s332
          %s334 = sshll.u32 [#allocation11], 4
          %s335 = int_to_ptr.vmem [resolvable:$true] %s334
          %340 = dma.hbm_to_vmem [thread:$0]  %s5, 1024, %s335, [#allocation12], 64, 64, 4
        $region24: #{tpu_custom_call.1} parent=11 // pred_fallthru
          _
        // Predicated region
        $region25: #{tpu_custom_call.1} parent=11 // pred_check
          %p341 = pneg %p193
        $region26: #{tpu_custom_call.1} parent=11 // pred_check_branch
          %343 = sbr.rel (%p341) target = $region28
        $region27: #{tpu_custom_call.1} parent=11 // pred_region
          _
        $region28: #{tpu_custom_call.1} parent=11 // pred_fallthru
          _
        // Predicated region
        $region29: #{tpu_custom_call.1} parent=11 // pred_check
          %p344 = pneg %p214
        $region30: #{tpu_custom_call.1} parent=11 // pred_check_branch
          %346 = sbr.rel (%p344) target = $region32
        $region31: #{tpu_custom_call.1} parent=11 // pred_region
          _
        $region32: #{tpu_custom_call.1} parent=11 // pred_fallthru
          _
        // Predicated region
        $region33: #{tpu_custom_call.1} parent=11 // pred_check
          %p347 = pneg %p235
        $region34: #{tpu_custom_call.1} parent=11 // pred_check_branch
          %349 = sbr.rel (%p347) target = $region36
        $region35: #{tpu_custom_call.1} parent=11 // pred_region
          _
        $region36: #{tpu_custom_call.1} parent=11 // pred_fallthru
          _
      $region12: #{tpu_custom_call.1} parent=5 // pred_fallthru
        _
      %p350 = scmp.lt.s32.totalorder %s31, 2
      // Predicated region
      $region37: #{tpu_custom_call.1} parent=5 // pred_check
        %p351 = pneg %p350
      $region38: #{tpu_custom_call.1} parent=5 // pred_check_branch
        %353 = sbr.rel (%p351) target = $region40
      $region39: #{tpu_custom_call.1} parent=5 // pred_region
        // Predicated region
        $region41: #{tpu_custom_call.1} parent=39 // pred_check
          %p354 = pneg %p51
        $region42: #{tpu_custom_call.1} parent=39 // pred_check_branch
          %356 = sbr.rel (%p354) target = $region44
        $region43: #{tpu_custom_call.1} parent=39 // pred_region
          %s357 = sand.u32 %s41, 1
          %s358 = scalar_lea.sflag [#allocation3], %s357
          %s359 = sand.u32 %s41, 1
          %s360 = smul.addr %s359, 160
          %s361 = scalar_lea.vmem [#allocation2], %s360
          %s362 = smul.u32 20, %s31
          %s364 = ssub.s32 2560, 2560
          %365 = vsyncadd %s358, %s364
          %s366 = smul.addr %s362, 128
          %s367 = scalar_lea.hbm %s0, %s366
          %s368 = sshll.u32 %s361, 4
          %s369 = int_to_ptr.vmem [resolvable:$true] %s368
          %374 = dma.hbm_to_vmem [thread:$0]  %s367, 2560, %s369, %s358, 128, 128, 8
        $region44: #{tpu_custom_call.1} parent=39 // pred_fallthru
          _
        // Predicated region
        $region45: #{tpu_custom_call.1} parent=39 // pred_check
          %p375 = pneg %p77
        $region46: #{tpu_custom_call.1} parent=39 // pred_check_branch
          %377 = sbr.rel (%p375) target = $region48
        $region47: #{tpu_custom_call.1} parent=39 // pred_region
          %s378 = sand.u32 %s31, 1
          %s379 = scalar_lea.sflag [#allocation6], %s378
          %s380 = sand.u32 %s67, 1
          %s381 = smul.addr %s380, 160
          %s382 = scalar_lea.vmem [#allocation5], %s381
          %s383 = smul.u32 20, %s31
          %s385 = ssub.s32 2560, 2560
          %386 = vsyncadd %s379, %s385
          %s387 = smul.addr %s383, 128
          %s388 = scalar_lea.hbm %s1, %s387
          %s389 = sshll.u32 %s382, 4
          %s390 = int_to_ptr.vmem [resolvable:$true] %s389
          %395 = dma.hbm_to_vmem [thread:$0]  %s388, 2560, %s390, %s379, 128, 128, 8
        $region48: #{tpu_custom_call.1} parent=39 // pred_fallthru
          _
        // Predicated region
        $region49: #{tpu_custom_call.1} parent=39 // pred_check
          %p396 = pneg %p103
        $region50: #{tpu_custom_call.1} parent=39 // pred_check_branch
          %398 = sbr.rel (%p396) target = $region52
        $region51: #{tpu_custom_call.1} parent=39 // pred_region
          %s399 = sand.u32 %s31, 1
          %s400 = scalar_lea.sflag [#allocation6], %s399
          %s401 = sand.u32 %s93, 1
          %s402 = smul.addr %s401, 160
          %s403 = scalar_lea.vmem [#allocation7], %s402
          %s404 = smul.u32 20, %s31
          %s406 = ssub.s32 2560, 2560
          %407 = vsyncadd %s400, %s406
          %s408 = smul.addr %s404, 128
          %s409 = scalar_lea.hbm %s2, %s408
          %s410 = sshll.u32 %s403, 4
          %s411 = int_to_ptr.vmem [resolvable:$true] %s410
          %416 = dma.hbm_to_vmem [thread:$0]  %s409, 2560, %s411, %s400, 128, 128, 8
        $region52: #{tpu_custom_call.1} parent=39 // pred_fallthru
          _
      $region40: #{tpu_custom_call.1} parent=5 // pred_fallthru
        _
      %p417 = scmp.le.s32.totalorder 1, %s31
      %p418 = scmp.lt.s32.totalorder %s31, 3
      %p419 = pnand %p417, %p418
      %p420 = pneg %p419
      // Predicated region
      $region53: #{tpu_custom_call.1} parent=5 // pred_check
        _
      $region54: #{tpu_custom_call.1} parent=5 // pred_check_branch
        %422 = sbr.rel (%p419) target = $region56
      $region55: #{tpu_custom_call.1} parent=5 // pred_region
        %s423 = ssub.s32 %s31, 1
        %s424 = sand.u32 %s44, 1
        %s425 = scalar_lea.sflag [#allocation3], %s424
        %s426 = sand.u32 %s44, 1
        %s427 = smul.addr %s426, 160
        %s428 = scalar_lea.vmem [#allocation2], %s427
        // Predicated region
        $region57: #{tpu_custom_call.1} parent=55 // pred_check
          %p429 = pneg %p57
        $region58: #{tpu_custom_call.1} parent=55 // pred_check_branch
          %431 = sbr.rel (%p429) target = $region60
        $region59: #{tpu_custom_call.1} parent=55 // pred_region
          %432 = dma.done %s425, 2560
        $region60: #{tpu_custom_call.1} parent=55 // pred_fallthru
          _
        %s433 = sand.u32 %s36, 1
        %s434 = scalar_lea.sflag [#allocation6], %s433
        %s435 = sand.u32 %s70, 1
        %s436 = smul.addr %s435, 160
        %s437 = scalar_lea.vmem [#allocation5], %s436
        // Predicated region
        $region61: #{tpu_custom_call.1} parent=55 // pred_check
          %p438 = pneg %p83
        $region62: #{tpu_custom_call.1} parent=55 // pred_check_branch
          %440 = sbr.rel (%p438) target = $region64
        $region63: #{tpu_custom_call.1} parent=55 // pred_region
          %441 = dma.done %s434, 2560
        $region64: #{tpu_custom_call.1} parent=55 // pred_fallthru
          _
        %s442 = sand.u32 %s36, 1
        %s443 = scalar_lea.sflag [#allocation6], %s442
        %s444 = sand.u32 %s96, 1
        %s445 = smul.addr %s444, 160
        %s446 = scalar_lea.vmem [#allocation7], %s445
        // Predicated region
        $region65: #{tpu_custom_call.1} parent=55 // pred_check
          %p447 = pneg %p109
        $region66: #{tpu_custom_call.1} parent=55 // pred_check_branch
          %449 = sbr.rel (%p447) target = $region68
        $region67: #{tpu_custom_call.1} parent=55 // pred_region
          %450 = dma.done %s443, 2560
        $region68: #{tpu_custom_call.1} parent=55 // pred_fallthru
          _
        // Predicated region
        $region69: #{tpu_custom_call.1} parent=55 // pred_check
          %p451 = pneg %p130
        $region70: #{tpu_custom_call.1} parent=55 // pred_check_branch
          %453 = sbr.rel (%p451) target = $region72
        $region71: #{tpu_custom_call.1} parent=55 // pred_region
          %454 = dma.done [#allocation9], 1024
        $region72: #{tpu_custom_call.1} parent=55 // pred_fallthru
          _
        // Predicated region
        $region73: #{tpu_custom_call.1} parent=55 // pred_check
          %p455 = pneg %p151
        $region74: #{tpu_custom_call.1} parent=55 // pred_check_branch
          %457 = sbr.rel (%p455) target = $region76
        $region75: #{tpu_custom_call.1} parent=55 // pred_region
          %458 = dma.done [#allocation9], 1024
        $region76: #{tpu_custom_call.1} parent=55 // pred_fallthru
          _
        // Predicated region
        $region77: #{tpu_custom_call.1} parent=55 // pred_check
          %p459 = pneg %p172
        $region78: #{tpu_custom_call.1} parent=55 // pred_check_branch
          %461 = sbr.rel (%p459) target = $region80
        $region79: #{tpu_custom_call.1} parent=55 // pred_region
          %462 = dma.done [#allocation12], 1024
        $region80: #{tpu_custom_call.1} parent=55 // pred_fallthru
          _
        %s463 = sand.u32 %s44, 1
        %s464 = scalar_lea.sflag [#allocation3], %s463
        %s465 = sand.u32 %s44, 1
        %s466 = smul.addr %s465, 160
        %s467 = scalar_lea.vmem [#allocation2], %s466
        %p468 = pneg %p57
        %p469 = pneg %p54
        %s470 = sand.u32 %s36, 1
        %s471 = scalar_lea.sflag [#allocation6], %s470
        %s472 = sand.u32 %s70, 1
        %s473 = smul.addr %s472, 160
        %s474 = scalar_lea.vmem [#allocation5], %s473
        %p475 = pneg %p83
        %p476 = pneg %p80
        %s477 = sand.u32 %s36, 1
        %s478 = scalar_lea.sflag [#allocation6], %s477
        %s479 = sand.u32 %s96, 1
        %s480 = smul.addr %s479, 160
        %s481 = scalar_lea.vmem [#allocation7], %s480
        %p482 = pneg %p109
        %p483 = pneg %p106
        %p484 = pneg %p130
        %p485 = pneg %p127
        %p486 = pneg %p151
        %p487 = pneg %p148
        %p488 = pneg %p172
        %p489 = pneg %p169
        %p490 = pneg %p193
        %p491 = pneg %p190
        %p492 = pneg %p214
        %p493 = pneg %p211
        %p494 = pneg %p235
        %p495 = pneg %p232
        %p496 = pneg %p261
        %p497 = pneg %p258
        %s498 = sand.u32 %s248, 1
        %s499 = scalar_lea.sflag [#allocation4], %s498
        %s500 = sand.u32 %s248, 1
        %s501 = smul.addr %s500, 160
        %s502 = scalar_lea.vmem [#allocation13], %s501
        %p503 = pneg %p287
        %p504 = pneg %p284
        %s505 = sand.u32 %s274, 1
        %s506 = scalar_lea.sflag [#allocation15], %s505
        %s507 = sand.u32 %s274, 1
        %s508 = smul.addr %s507, 160
        %s509 = scalar_lea.vmem [#allocation14], %s508
        %s510 = smul.u32 20, %s36
        %s511 = smul.u32 20, %s36
        %s512 = smul.u32 20, %s36
        %s513 = smul.u32 20, %s36
        %s514 = smul.u32 5, %s36
        %v516 = vld [vmem:[%s428] sm:$0xff]
        %v517 = vld [vmem:[%s428 + $0x8] sm:$0xff]
        %v518 = vld [vmem:[%s428 + $0x10] sm:$0xff]
        %v519 = vld [vmem:[%s428 + $0x18] sm:$0xff]
        %v520 = vld [vmem:[%s428 + $0x20] sm:$0xff]
        %v521 = vld [vmem:[%s428 + $0x28] sm:$0xff]
        %v522 = vld [vmem:[%s428 + $0x30] sm:$0xff]
        %v523 = vld [vmem:[%s428 + $0x38] sm:$0xff]
        %v524 = vld [vmem:[%s428 + $0x40] sm:$0xff]
        %v525 = vld [vmem:[%s428 + $0x48] sm:$0xff]
        %v526 = vld [vmem:[%s428 + $0x50] sm:$0xff]
        %v527 = vld [vmem:[%s428 + $0x58] sm:$0xff]
        %v528 = vld [vmem:[%s428 + $0x60] sm:$0xff]
        %v529 = vld [vmem:[%s428 + $0x68] sm:$0xff]
        %v530 = vld [vmem:[%s428 + $0x70] sm:$0xff]
        %v531 = vld [vmem:[%s428 + $0x78] sm:$0xff]
        %v532 = vld [vmem:[%s428 + $0x80] sm:$0xff]
        %v533 = vld [vmem:[%s428 + $0x88] sm:$0xff]
        %v534 = vld [vmem:[%s428 + $0x90] sm:$0xff]
        %v535 = vld [vmem:[%s428 + $0x98] sm:$0xff]
        %v536 = vpack.c.bf16 %v517, %v516
        %v537 = vpack.c.bf16 %v519, %v518
        %v538 = vpack.c.bf16 %v521, %v520
        %v539 = vpack.c.bf16 %v523, %v522
        %v540 = vpack.c.bf16 %v525, %v524
        %v541 = vpack.c.bf16 %v527, %v526
        %v542 = vpack.c.bf16 %v529, %v528
        %v543 = vpack.c.bf16 %v531, %v530
        %v544 = vpack.c.bf16 %v533, %v532
        %v545 = vpack.c.bf16 %v535, %v534
        %v546 = vld [vmem:[#allocation8] sm:$0xf]
        %v547 = vld [vmem:[#allocation8 + $0x4] sm:$0xf]
        %v548 = vld [vmem:[#allocation8 + $0x8] sm:$0xf]
        %v549 = vld [vmem:[#allocation8 + $0xc] sm:$0xf]
        %v550 = vld [vmem:[#allocation8 + $0x10] sm:$0xf]
        %v551 = vld [vmem:[#allocation8 + $0x14] sm:$0xf]
        %v552 = vld [vmem:[#allocation8 + $0x18] sm:$0xf]
        %v553 = vld [vmem:[#allocation8 + $0x1c] sm:$0xf]
        %v554 = vld [vmem:[#allocation8 + $0x20] sm:$0xf]
        %v555 = vld [vmem:[#allocation8 + $0x24] sm:$0xf]
        %v556 = vld [vmem:[#allocation8 + $0x28] sm:$0xf]
        %v557 = vld [vmem:[#allocation8 + $0x2c] sm:$0xf]
        %v558 = vld [vmem:[#allocation8 + $0x30] sm:$0xf]
        %v559 = vld [vmem:[#allocation8 + $0x34] sm:$0xf]
        %v560 = vld [vmem:[#allocation8 + $0x38] sm:$0xf]
        %v561 = vld [vmem:[#allocation8 + $0x3c] sm:$0xf]
        %v562 = vld [vmem:[%s6] sm:$0x1]
        %v564 = vlaneseq
        %v565 = vshrl.u32 %v564, 7
        %v566 = vsub.s32 0, %v565
        %v567 = vrot.slane %v562, %v566
        %v585 = vunpack.c.l.b16 %v546
        %v586 = vunpack.c.l.b16 %v547
        %v587 = vunpack.c.l.b16 %v548
        %v588 = vunpack.c.l.b16 %v549
        %v589 = vunpack.c.l.b16 %v550
        %v590 = vunpack.c.l.b16 %v551
        %v591 = vunpack.c.l.b16 %v552
        %v592 = vunpack.c.l.b16 %v553
        %v593 = vunpack.c.l.b16 %v554
        %v594 = vunpack.c.l.b16 %v555
        %v595 = vunpack.c.l.b16 %v556
        %v596 = vunpack.c.l.b16 %v557
        %v597 = vunpack.c.l.b16 %v558
        %v598 = vunpack.c.l.b16 %v559
        %v599 = vunpack.c.l.b16 %v560
        %v600 = vunpack.c.l.b16 %v561
        %v601 = vpack.c.b16 %v586, %v585
        %v602 = vpack.c.b16 %v588, %v587
        %v603 = vpack.c.b16 %v590, %v589
        %v604 = vpack.c.b16 %v592, %v591
        %v605 = vpack.c.b16 %v594, %v593
        %v606 = vpack.c.b16 %v596, %v595
        %v607 = vpack.c.b16 %v598, %v597
        %v608 = vpack.c.b16 %v600, %v599
        %617 = vmatprep.subr.bf16.mxu0 0
        %618 = vmatpush1.bf16.msra.mxu0 %v601
        %619 = vmatprep.subr.bf16.mxu0 0
        %620 = vmatpush1.bf16.msra.mxu0 %v602
        %621 = vmatprep.subr.bf16.mxu0 0
        %622 = vmatpush1.bf16.msra.mxu0 %v603
        %623 = vmatprep.subr.bf16.mxu0 0
        %624 = vmatpush1.bf16.msra.mxu0 %v604
        %625 = vmatprep.subr.bf16.mxu0 0
        %626 = vmatpush1.bf16.msra.mxu0 %v605
        %627 = vmatprep.subr.bf16.mxu0 0
        %628 = vmatpush1.bf16.msra.mxu0 %v606
        %629 = vmatprep.subr.bf16.mxu0 0
        %630 = vmatpush1.bf16.msra.mxu0 %v607
        %631 = vmatprep.subr.bf16.mxu0 0
        %632 = vmatpush1.bf16.msra.mxu0 %v608
        %633 = vmatprep.subr.bf16.mxu0 0
        %634 = vmatpush1.bf16.msra.mxu0 0
        %635 = vmatprep.subr.bf16.mxu0 0
        %636 = vmatpush1.bf16.msra.mxu0 0
        %637 = vmatprep.subr.bf16.mxu0 0
        %638 = vmatpush1.bf16.msra.mxu0 0
        %639 = vmatprep.subr.bf16.mxu0 0
        %640 = vmatpush1.bf16.msra.mxu0 0
        %641 = vmatprep.subr.bf16.mxu0 0
        %642 = vmatpush1.bf16.msra.mxu0 0
        %643 = vmatprep.subr.bf16.mxu0 0
        %644 = vmatpush1.bf16.msra.mxu0 0
        %645 = vmatprep.subr.bf16.mxu0 0
        %646 = vmatpush1.bf16.msra.mxu0 0
        %647 = vmatprep.subr.bf16.mxu0 0
        %648 = vmatpush1.bf16.msra.mxu0 0
        %649 = vmatprep.mubr.bf16.mxu0 0
        %650 = vmatmul.mubr.bf16.gmra.mrb[0].mxu0 %v536
        %v651 = vpop.f32.mrb[0].mxu0
        %v652 = vadd.f32 %v567, %v651
        %v653 = vpop.f32.mrb[0].mxu0
        %v654 = vpop.f32.mrb[0].mxu0
        %v655 = vadd.f32 %v567, %v654
        %v656 = vpop.f32.mrb[0].mxu0
        %657 = vmatprep.mubr.bf16.mxu0 0
        %658 = vmatmul.mubr.bf16.gmra.mrb[0].mxu0 %v537
        %v659 = vpop.f32.mrb[0].mxu0
        %v660 = vadd.f32 %v567, %v659
        %v661 = vpop.f32.mrb[0].mxu0
        %v662 = vpop.f32.mrb[0].mxu0
        %v663 = vadd.f32 %v567, %v662
        %v664 = vpop.f32.mrb[0].mxu0
        %665 = vmatprep.mubr.bf16.mxu0 0
        %666 = vmatmul.mubr.bf16.gmra.mrb[0].mxu0 %v538
        %v667 = vpop.f32.mrb[0].mxu0
        %v668 = vadd.f32 %v567, %v667
        %v669 = vpop.f32.mrb[0].mxu0
        %v670 = vpop.f32.mrb[0].mxu0
        %v671 = vadd.f32 %v567, %v670
        %v672 = vpop.f32.mrb[0].mxu0
        %673 = vmatprep.mubr.bf16.mxu0 0
        %674 = vmatmul.mubr.bf16.gmra.mrb[0].mxu0 %v539
        %v675 = vpop.f32.mrb[0].mxu0
        %v676 = vadd.f32 %v567, %v675
        %v677 = vpop.f32.mrb[0].mxu0
        %v678 = vpop.f32.mrb[0].mxu0
        %v679 = vadd.f32 %v567, %v678
        %v680 = vpop.f32.mrb[0].mxu0
        %681 = vmatprep.mubr.bf16.mxu0 0
        %682 = vmatmul.mubr.bf16.gmra.mrb[0].mxu0 %v540
        %v683 = vpop.f32.mrb[0].mxu0
        %v684 = vadd.f32 %v567, %v683
        %v685 = vpop.f32.mrb[0].mxu0
        %v686 = vpop.f32.mrb[0].mxu0
        %v687 = vadd.f32 %v567, %v686
        %v688 = vpop.f32.mrb[0].mxu0
        %689 = vmatprep.mubr.bf16.mxu0 0
        %690 = vmatmul.mubr.bf16.gmra.mrb[0].mxu0 %v541
        %v691 = vpop.f32.mrb[0].mxu0
        %v692 = vadd.f32 %v567, %v691
        %v693 = vpop.f32.mrb[0].mxu0
        %v694 = vpop.f32.mrb[0].mxu0
        %v695 = vadd.f32 %v567, %v694
        %v696 = vpop.f32.mrb[0].mxu0
        %697 = vmatprep.mubr.bf16.mxu0 0
        %698 = vmatmul.mubr.bf16.gmra.mrb[0].mxu0 %v542
        %v699 = vpop.f32.mrb[0].mxu0
        %v700 = vadd.f32 %v567, %v699
        %v701 = vpop.f32.mrb[0].mxu0
        %v702 = vpop.f32.mrb[0].mxu0
        %v703 = vadd.f32 %v567, %v702
        %v704 = vpop.f32.mrb[0].mxu0
        %705 = vmatprep.mubr.bf16.mxu0 0
        %706 = vmatmul.mubr.bf16.gmra.mrb[0].mxu0 %v543
        %v707 = vpop.f32.mrb[0].mxu0
        %v708 = vadd.f32 %v567, %v707
        %v709 = vpop.f32.mrb[0].mxu0
        %v710 = vpop.f32.mrb[0].mxu0
        %v711 = vadd.f32 %v567, %v710
        %v712 = vpop.f32.mrb[0].mxu0
        %713 = vmatprep.mubr.bf16.mxu0 0
        %714 = vmatmul.mubr.bf16.gmra.mrb[0].mxu0 %v544
        %v715 = vpop.f32.mrb[0].mxu0
        %v716 = vadd.f32 %v567, %v715
        %v717 = vpop.f32.mrb[0].mxu0
        %v718 = vpop.f32.mrb[0].mxu0
        %v719 = vadd.f32 %v567, %v718
        %v720 = vpop.f32.mrb[0].mxu0
        %721 = vmatprep.mubr.bf16.mxu0 0
        %722 = vmatmul.mubr.bf16.gmra.mrb[0].mxu0 %v545
        %v723 = vpop.f32.mrb[0].mxu0
        %v724 = vadd.f32 %v567, %v723
        %v725 = vpop.f32.mrb[0].mxu0
        %v726 = vpop.f32.mrb[0].mxu0
        %v727 = vadd.f32 %v567, %v726
        %v728 = vpop.f32.mrb[0].mxu0
        %729 = vdwg.mxu0
        %v730 = vld [vmem:[%s437] sm:$0xff]
        %v731 = vld [vmem:[%s437 + $0x8] sm:$0xff]
        %v732 = vld [vmem:[%s437 + $0x10] sm:$0xff]
        %v733 = vld [vmem:[%s437 + $0x18] sm:$0xff]
        %v734 = vld [vmem:[%s437 + $0x20] sm:$0xff]
        %v735 = vld [vmem:[%s437 + $0x28] sm:$0xff]
        %v736 = vld [vmem:[%s437 + $0x30] sm:$0xff]
        %v737 = vld [vmem:[%s437 + $0x38] sm:$0xff]
        %v738 = vld [vmem:[%s437 + $0x40] sm:$0xff]
        %v739 = vld [vmem:[%s437 + $0x48] sm:$0xff]
        %v740 = vld [vmem:[%s437 + $0x50] sm:$0xff]
        %v741 = vld [vmem:[%s437 + $0x58] sm:$0xff]
        %v742 = vld [vmem:[%s437 + $0x60] sm:$0xff]
        %v743 = vld [vmem:[%s437 + $0x68] sm:$0xff]
        %v744 = vld [vmem:[%s437 + $0x70] sm:$0xff]
        %v745 = vld [vmem:[%s437 + $0x78] sm:$0xff]
        %v746 = vld [vmem:[%s437 + $0x80] sm:$0xff]
        %v747 = vld [vmem:[%s437 + $0x88] sm:$0xff]
        %v748 = vld [vmem:[%s437 + $0x90] sm:$0xff]
        %v749 = vld [vmem:[%s437 + $0x98] sm:$0xff]
        %v750 = vpack.c.bf16 %v731, %v730
        %v751 = vpack.c.bf16 %v733, %v732
        %v752 = vpack.c.bf16 %v735, %v734
        %v753 = vpack.c.bf16 %v737, %v736
        %v754 = vpack.c.bf16 %v739, %v738
        %v755 = vpack.c.bf16 %v741, %v740
        %v756 = vpack.c.bf16 %v743, %v742
        %v757 = vpack.c.bf16 %v745, %v744
        %v758 = vpack.c.bf16 %v747, %v746
        %v759 = vpack.c.bf16 %v749, %v748
        %v760 = vld [vmem:[#allocation10] sm:$0xf]
        %v761 = vld [vmem:[#allocation10 + $0x4] sm:$0xf]
        %v762 = vld [vmem:[#allocation10 + $0x8] sm:$0xf]
        %v763 = vld [vmem:[#allocation10 + $0xc] sm:$0xf]
        %v764 = vld [vmem:[#allocation10 + $0x10] sm:$0xf]
        %v765 = vld [vmem:[#allocation10 + $0x14] sm:$0xf]
        %v766 = vld [vmem:[#allocation10 + $0x18] sm:$0xf]
        %v767 = vld [vmem:[#allocation10 + $0x1c] sm:$0xf]
        %v768 = vld [vmem:[#allocation10 + $0x20] sm:$0xf]
        %v769 = vld [vmem:[#allocation10 + $0x24] sm:$0xf]
        %v770 = vld [vmem:[#allocation10 + $0x28] sm:$0xf]
        %v771 = vld [vmem:[#allocation10 + $0x2c] sm:$0xf]
        %v772 = vld [vmem:[#allocation10 + $0x30] sm:$0xf]
        %v773 = vld [vmem:[#allocation10 + $0x34] sm:$0xf]
        %v774 = vld [vmem:[#allocation10 + $0x38] sm:$0xf]
        %v775 = vld [vmem:[#allocation10 + $0x3c] sm:$0xf]
        %v776 = vld [vmem:[%s7] sm:$0x1]
        %v778 = vlaneseq
        %v779 = vshrl.u32 %v778, 7
        %v780 = vsub.s32 0, %v779
        %v781 = vrot.slane %v776, %v780
        %v799 = vunpack.c.l.b16 %v760
        %v800 = vunpack.c.l.b16 %v761
        %v801 = vunpack.c.l.b16 %v762
        %v802 = vunpack.c.l.b16 %v763
        %v803 = vunpack.c.l.b16 %v764
        %v804 = vunpack.c.l.b16 %v765
        %v805 = vunpack.c.l.b16 %v766
        %v806 = vunpack.c.l.b16 %v767
        %v807 = vunpack.c.l.b16 %v768
        %v808 = vunpack.c.l.b16 %v769
        %v809 = vunpack.c.l.b16 %v770
        %v810 = vunpack.c.l.b16 %v771
        %v811 = vunpack.c.l.b16 %v772
        %v812 = vunpack.c.l.b16 %v773
        %v813 = vunpack.c.l.b16 %v774
        %v814 = vunpack.c.l.b16 %v775
        %v815 = vpack.c.b16 %v800, %v799
        %v816 = vpack.c.b16 %v802, %v801
        %v817 = vpack.c.b16 %v804, %v803
        %v818 = vpack.c.b16 %v806, %v805
        %v819 = vpack.c.b16 %v808, %v807
        %v820 = vpack.c.b16 %v810, %v809
        %v821 = vpack.c.b16 %v812, %v811
        %v822 = vpack.c.b16 %v814, %v813
        %831 = vmatprep.subr.bf16.mxu0 0
        %832 = vmatpush1.bf16.msra.mxu0 %v815
        %833 = vmatprep.subr.bf16.mxu0 0
        %834 = vmatpush1.bf16.msra.mxu0 %v816
        %835 = vmatprep.subr.bf16.mxu0 0
        %836 = vmatpush1.bf16.msra.mxu0 %v817
        %837 = vmatprep.subr.bf16.mxu0 0
        %838 = vmatpush1.bf16.msra.mxu0 %v818
        %839 = vmatprep.subr.bf16.mxu0 0
        %840 = vmatpush1.bf16.msra.mxu0 %v819
        %841 = vmatprep.subr.bf16.mxu0 0
        %842 = vmatpush1.bf16.msra.mxu0 %v820
        %843 = vmatprep.subr.bf16.mxu0 0
        %844 = vmatpush1.bf16.msra.mxu0 %v821
        %845 = vmatprep.subr.bf16.mxu0 0
        %846 = vmatpush1.bf16.msra.mxu0 %v822
        %847 = vmatprep.subr.bf16.mxu0 0
        %848 = vmatpush1.bf16.msra.mxu0 0
        %849 = vmatprep.subr.bf16.mxu0 0
        %850 = vmatpush1.bf16.msra.mxu0 0
        %851 = vmatprep.subr.bf16.mxu0 0
        %852 = vmatpush1.bf16.msra.mxu0 0
        %853 = vmatprep.subr.bf16.mxu0 0
        %854 = vmatpush1.bf16.msra.mxu0 0
        %855 = vmatprep.subr.bf16.mxu0 0
        %856 = vmatpush1.bf16.msra.mxu0 0
        %857 = vmatprep.subr.bf16.mxu0 0
        %858 = vmatpush1.bf16.msra.mxu0 0
        %859 = vmatprep.subr.bf16.mxu0 0
        %860 = vmatpush1.bf16.msra.mxu0 0
        %861 = vmatprep.subr.bf16.mxu0 0
        %862 = vmatpush1.bf16.msra.mxu0 0
        %863 = vmatprep.mubr.bf16.mxu0 0
        %864 = vmatmul.mubr.bf16.gmra.mrb[0].mxu0 %v750
        %v865 = vpop.f32.mrb[0].mxu0
        %v866 = vadd.f32 %v781, %v865
        %v867 = vpop.f32.mrb[0].mxu0
        %v868 = vpop.f32.mrb[0].mxu0
        %v869 = vadd.f32 %v781, %v868
        %v870 = vpop.f32.mrb[0].mxu0
        %871 = vmatprep.mubr.bf16.mxu0 0
        %872 = vmatmul.mubr.bf16.gmra.mrb[0].mxu0 %v751
        %v873 = vpop.f32.mrb[0].mxu0
        %v874 = vadd.f32 %v781, %v873
        %v875 = vpop.f32.mrb[0].mxu0
        %v876 = vpop.f32.mrb[0].mxu0
        %v877 = vadd.f32 %v781, %v876
        %v878 = vpop.f32.mrb[0].mxu0
        %879 = vmatprep.mubr.bf16.mxu0 0
        %880 = vmatmul.mubr.bf16.gmra.mrb[0].mxu0 %v752
        %v881 = vpop.f32.mrb[0].mxu0
        %v882 = vadd.f32 %v781, %v881
        %v883 = vpop.f32.mrb[0].mxu0
        %v884 = vpop.f32.mrb[0].mxu0
        %v885 = vadd.f32 %v781, %v884
        %v886 = vpop.f32.mrb[0].mxu0
        %887 = vmatprep.mubr.bf16.mxu0 0
        %888 = vmatmul.mubr.bf16.gmra.mrb[0].mxu0 %v753
        %v889 = vpop.f32.mrb[0].mxu0
        %v890 = vadd.f32 %v781, %v889
        %v891 = vpop.f32.mrb[0].mxu0
        %v892 = vpop.f32.mrb[0].mxu0
        %v893 = vadd.f32 %v781, %v892
        %v894 = vpop.f32.mrb[0].mxu0
        %895 = vmatprep.mubr.bf16.mxu0 0
        %896 = vmatmul.mubr.bf16.gmra.mrb[0].mxu0 %v754
        %v897 = vpop.f32.mrb[0].mxu0
        %v898 = vadd.f32 %v781, %v897
        %v899 = vpop.f32.mrb[0].mxu0
        %v900 = vpop.f32.mrb[0].mxu0
        %v901 = vadd.f32 %v781, %v900
        %v902 = vpop.f32.mrb[0].mxu0
        %903 = vmatprep.mubr.bf16.mxu0 0
        %904 = vmatmul.mubr.bf16.gmra.mrb[0].mxu0 %v755
        %v905 = vpop.f32.mrb[0].mxu0
        %v906 = vadd.f32 %v781, %v905
        %v907 = vpop.f32.mrb[0].mxu0
        %v908 = vpop.f32.mrb[0].mxu0
        %v909 = vadd.f32 %v781, %v908
        %v910 = vpop.f32.mrb[0].mxu0
        %911 = vmatprep.mubr.bf16.mxu0 0
        %912 = vmatmul.mubr.bf16.gmra.mrb[0].mxu0 %v756
        %v913 = vpop.f32.mrb[0].mxu0
        %v914 = vadd.f32 %v781, %v913
        %v915 = vpop.f32.mrb[0].mxu0
        %v916 = vpop.f32.mrb[0].mxu0
        %v917 = vadd.f32 %v781, %v916
        %v918 = vpop.f32.mrb[0].mxu0
        %919 = vmatprep.mubr.bf16.mxu0 0
        %920 = vmatmul.mubr.bf16.gmra.mrb[0].mxu0 %v757
        %v921 = vpop.f32.mrb[0].mxu0
        %v922 = vadd.f32 %v781, %v921
        %v923 = vpop.f32.mrb[0].mxu0
        %v924 = vpop.f32.mrb[0].mxu0
        %v925 = vadd.f32 %v781, %v924
        %v926 = vpop.f32.mrb[0].mxu0
        %927 = vmatprep.mubr.bf16.mxu0 0
        %928 = vmatmul.mubr.bf16.gmra.mrb[0].mxu0 %v758
        %v929 = vpop.f32.mrb[0].mxu0
        %v930 = vadd.f32 %v781, %v929
        %v931 = vpop.f32.mrb[0].mxu0
        %v932 = vpop.f32.mrb[0].mxu0
        %v933 = vadd.f32 %v781, %v932
        %v934 = vpop.f32.mrb[0].mxu0
        %935 = vmatprep.mubr.bf16.mxu0 0
        %936 = vmatmul.mubr.bf16.gmra.mrb[0].mxu0 %v759
        %v937 = vpop.f32.mrb[0].mxu0
        %v938 = vadd.f32 %v781, %v937
        %v939 = vpop.f32.mrb[0].mxu0
        %v940 = vpop.f32.mrb[0].mxu0
        %v941 = vadd.f32 %v781, %v940
        %v942 = vpop.f32.mrb[0].mxu0
        %943 = vdwg.mxu0
        %v944 = vld [vmem:[%s446] sm:$0xff]
        %v945 = vld [vmem:[%s446 + $0x8] sm:$0xff]
        %v946 = vld [vmem:[%s446 + $0x10] sm:$0xff]
        %v947 = vld [vmem:[%s446 + $0x18] sm:$0xff]
        %v948 = vld [vmem:[%s446 + $0x20] sm:$0xff]
        %v949 = vld [vmem:[%s446 + $0x28] sm:$0xff]
        %v950 = vld [vmem:[%s446 + $0x30] sm:$0xff]
        %v951 = vld [vmem:[%s446 + $0x38] sm:$0xff]
        %v952 = vld [vmem:[%s446 + $0x40] sm:$0xff]
        %v953 = vld [vmem:[%s446 + $0x48] sm:$0xff]
        %v954 = vld [vmem:[%s446 + $0x50] sm:$0xff]
        %v955 = vld [vmem:[%s446 + $0x58] sm:$0xff]
        %v956 = vld [vmem:[%s446 + $0x60] sm:$0xff]
        %v957 = vld [vmem:[%s446 + $0x68] sm:$0xff]
        %v958 = vld [vmem:[%s446 + $0x70] sm:$0xff]
        %v959 = vld [vmem:[%s446 + $0x78] sm:$0xff]
        %v960 = vld [vmem:[%s446 + $0x80] sm:$0xff]
        %v961 = vld [vmem:[%s446 + $0x88] sm:$0xff]
        %v962 = vld [vmem:[%s446 + $0x90] sm:$0xff]
        %v963 = vld [vmem:[%s446 + $0x98] sm:$0xff]
        %v964 = vpack.c.bf16 %v945, %v944
        %v965 = vpack.c.bf16 %v947, %v946
        %v966 = vpack.c.bf16 %v949, %v948
        %v967 = vpack.c.bf16 %v951, %v950
        %v968 = vpack.c.bf16 %v953, %v952
        %v969 = vpack.c.bf16 %v955, %v954
        %v970 = vpack.c.bf16 %v957, %v956
        %v971 = vpack.c.bf16 %v959, %v958
        %v972 = vpack.c.bf16 %v961, %v960
        %v973 = vpack.c.bf16 %v963, %v962
        %v974 = vld [vmem:[#allocation11] sm:$0xf]
        %v975 = vld [vmem:[#allocation11 + $0x4] sm:$0xf]
        %v976 = vld [vmem:[#allocation11 + $0x8] sm:$0xf]
        %v977 = vld [vmem:[#allocation11 + $0xc] sm:$0xf]
        %v978 = vld [vmem:[#allocation11 + $0x10] sm:$0xf]
        %v979 = vld [vmem:[#allocation11 + $0x14] sm:$0xf]
        %v980 = vld [vmem:[#allocation11 + $0x18] sm:$0xf]
        %v981 = vld [vmem:[#allocation11 + $0x1c] sm:$0xf]
        %v982 = vld [vmem:[#allocation11 + $0x20] sm:$0xf]
        %v983 = vld [vmem:[#allocation11 + $0x24] sm:$0xf]
        %v984 = vld [vmem:[#allocation11 + $0x28] sm:$0xf]
        %v985 = vld [vmem:[#allocation11 + $0x2c] sm:$0xf]
        %v986 = vld [vmem:[#allocation11 + $0x30] sm:$0xf]
        %v987 = vld [vmem:[#allocation11 + $0x34] sm:$0xf]
        %v988 = vld [vmem:[#allocation11 + $0x38] sm:$0xf]
        %v989 = vld [vmem:[#allocation11 + $0x3c] sm:$0xf]
        %v990 = vld [vmem:[%s8] sm:$0x1]
        %v992 = vlaneseq
        %v993 = vshrl.u32 %v992, 7
        %v994 = vsub.s32 0, %v993
        %v995 = vrot.slane %v990, %v994
        %v1013 = vunpack.c.l.b16 %v974
        %v1014 = vunpack.c.l.b16 %v975
        %v1015 = vunpack.c.l.b16 %v976
        %v1016 = vunpack.c.l.b16 %v977
        %v1017 = vunpack.c.l.b16 %v978
        %v1018 = vunpack.c.l.b16 %v979
        %v1019 = vunpack.c.l.b16 %v980
        %v1020 = vunpack.c.l.b16 %v981
        %v1021 = vunpack.c.l.b16 %v982
        %v1022 = vunpack.c.l.b16 %v983
        %v1023 = vunpack.c.l.b16 %v984
        %v1024 = vunpack.c.l.b16 %v985
        %v1025 = vunpack.c.l.b16 %v986
        %v1026 = vunpack.c.l.b16 %v987
        %v1027 = vunpack.c.l.b16 %v988
        %v1028 = vunpack.c.l.b16 %v989
        %v1029 = vpack.c.b16 %v1014, %v1013
        %v1030 = vpack.c.b16 %v1016, %v1015
        %v1031 = vpack.c.b16 %v1018, %v1017
        %v1032 = vpack.c.b16 %v1020, %v1019
        %v1033 = vpack.c.b16 %v1022, %v1021
        %v1034 = vpack.c.b16 %v1024, %v1023
        %v1035 = vpack.c.b16 %v1026, %v1025
        %v1036 = vpack.c.b16 %v1028, %v1027
        %1045 = vmatprep.subr.bf16.mxu0 0
        %1046 = vmatpush1.bf16.msra.mxu0 %v1029
        %1047 = vmatprep.subr.bf16.mxu0 0
        %1048 = vmatpush1.bf16.msra.mxu0 %v1030
        %1049 = vmatprep.subr.bf16.mxu0 0
        %1050 = vmatpush1.bf16.msra.mxu0 %v1031
        %1051 = vmatprep.subr.bf16.mxu0 0
        %1052 = vmatpush1.bf16.msra.mxu0 %v1032
        %1053 = vmatprep.subr.bf16.mxu0 0
        %1054 = vmatpush1.bf16.msra.mxu0 %v1033
        %1055 = vmatprep.subr.bf16.mxu0 0
        %1056 = vmatpush1.bf16.msra.mxu0 %v1034
        %1057 = vmatprep.subr.bf16.mxu0 0
        %1058 = vmatpush1.bf16.msra.mxu0 %v1035
        %1059 = vmatprep.subr.bf16.mxu0 0
        %1060 = vmatpush1.bf16.msra.mxu0 %v1036
        %1061 = vmatprep.subr.bf16.mxu0 0
        %1062 = vmatpush1.bf16.msra.mxu0 0
        %1063 = vmatprep.subr.bf16.mxu0 0
        %1064 = vmatpush1.bf16.msra.mxu0 0
        %1065 = vmatprep.subr.bf16.mxu0 0
        %1066 = vmatpush1.bf16.msra.mxu0 0
        %1067 = vmatprep.subr.bf16.mxu0 0
        %1068 = vmatpush1.bf16.msra.mxu0 0
        %1069 = vmatprep.subr.bf16.mxu0 0
        %1070 = vmatpush1.bf16.msra.mxu0 0
        %1071 = vmatprep.subr.bf16.mxu0 0
        %1072 = vmatpush1.bf16.msra.mxu0 0
        %1073 = vmatprep.subr.bf16.mxu0 0
        %1074 = vmatpush1.bf16.msra.mxu0 0
        %1075 = vmatprep.subr.bf16.mxu0 0
        %1076 = vmatpush1.bf16.msra.mxu0 0
        %1077 = vmatprep.mubr.bf16.mxu0 0
        %1078 = vmatmul.mubr.bf16.gmra.mrb[0].mxu0 %v964
        %v1079 = vpop.f32.mrb[0].mxu0
        %v1080 = vadd.f32 %v995, %v1079
        %v1081 = vpop.f32.mrb[0].mxu0
        %v1082 = vpop.f32.mrb[0].mxu0
        %v1083 = vadd.f32 %v995, %v1082
        %v1084 = vpop.f32.mrb[0].mxu0
        %1085 = vmatprep.mubr.bf16.mxu0 0
        %1086 = vmatmul.mubr.bf16.gmra.mrb[0].mxu0 %v965
        %v1087 = vpop.f32.mrb[0].mxu0
        %v1088 = vadd.f32 %v995, %v1087
        %v1089 = vpop.f32.mrb[0].mxu0
        %v1090 = vpop.f32.mrb[0].mxu0
        %v1091 = vadd.f32 %v995, %v1090
        %v1092 = vpop.f32.mrb[0].mxu0
        %1093 = vmatprep.mubr.bf16.mxu0 0
        %1094 = vmatmul.mubr.bf16.gmra.mrb[0].mxu0 %v966
        %v1095 = vpop.f32.mrb[0].mxu0
        %v1096 = vadd.f32 %v995, %v1095
        %v1097 = vpop.f32.mrb[0].mxu0
        %v1098 = vpop.f32.mrb[0].mxu0
        %v1099 = vadd.f32 %v995, %v1098
        %v1100 = vpop.f32.mrb[0].mxu0
        %1101 = vmatprep.mubr.bf16.mxu0 0
        %1102 = vmatmul.mubr.bf16.gmra.mrb[0].mxu0 %v967
        %v1103 = vpop.f32.mrb[0].mxu0
        %v1104 = vadd.f32 %v995, %v1103
        %v1105 = vpop.f32.mrb[0].mxu0
        %v1106 = vpop.f32.mrb[0].mxu0
        %v1107 = vadd.f32 %v995, %v1106
        %v1108 = vpop.f32.mrb[0].mxu0
        %1109 = vmatprep.mubr.bf16.mxu0 0
        %1110 = vmatmul.mubr.bf16.gmra.mrb[0].mxu0 %v968
        %v1111 = vpop.f32.mrb[0].mxu0
        %v1112 = vadd.f32 %v995, %v1111
        %v1113 = vpop.f32.mrb[0].mxu0
        %v1114 = vpop.f32.mrb[0].mxu0
        %v1115 = vadd.f32 %v995, %v1114
        %v1116 = vpop.f32.mrb[0].mxu0
        %1117 = vmatprep.mubr.bf16.mxu0 0
        %1118 = vmatmul.mubr.bf16.gmra.mrb[0].mxu0 %v969
        %v1119 = vpop.f32.mrb[0].mxu0
        %v1120 = vadd.f32 %v995, %v1119
        %v1121 = vpop.f32.mrb[0].mxu0
        %v1122 = vpop.f32.mrb[0].mxu0
        %v1123 = vadd.f32 %v995, %v1122
        %v1124 = vpop.f32.mrb[0].mxu0
        %1125 = vmatprep.mubr.bf16.mxu0 0
        %1126 = vmatmul.mubr.bf16.gmra.mrb[0].mxu0 %v970
        %v1127 = vpop.f32.mrb[0].mxu0
        %v1128 = vadd.f32 %v995, %v1127
        %v1129 = vpop.f32.mrb[0].mxu0
        %v1130 = vpop.f32.mrb[0].mxu0
        %v1131 = vadd.f32 %v995, %v1130
        %v1132 = vpop.f32.mrb[0].mxu0
        %1133 = vmatprep.mubr.bf16.mxu0 0
        %1134 = vmatmul.mubr.bf16.gmra.mrb[0].mxu0 %v971
        %v1135 = vpop.f32.mrb[0].mxu0
        %v1136 = vadd.f32 %v995, %v1135
        %v1137 = vpop.f32.mrb[0].mxu0
        %v1138 = vpop.f32.mrb[0].mxu0
        %v1139 = vadd.f32 %v995, %v1138
        %v1140 = vpop.f32.mrb[0].mxu0
        %1141 = vmatprep.mubr.bf16.mxu0 0
        %1142 = vmatmul.mubr.bf16.gmra.mrb[0].mxu0 %v972
        %v1143 = vpop.f32.mrb[0].mxu0
        %v1144 = vadd.f32 %v995, %v1143
        %v1145 = vpop.f32.mrb[0].mxu0
        %v1146 = vpop.f32.mrb[0].mxu0
        %v1147 = vadd.f32 %v995, %v1146
        %v1148 = vpop.f32.mrb[0].mxu0
        %1149 = vmatprep.mubr.bf16.mxu0 0
        %1150 = vmatmul.mubr.bf16.gmra.mrb[0].mxu0 %v973
        %v1151 = vpop.f32.mrb[0].mxu0
        %v1152 = vadd.f32 %v995, %v1151
        %v1153 = vpop.f32.mrb[0].mxu0
        %v1154 = vpop.f32.mrb[0].mxu0
        %v1155 = vadd.f32 %v995, %v1154
        %v1156 = vpop.f32.mrb[0].mxu0
        %1157 = vdwg.mxu0
        %v1158 = vpack.c.bf16 %v655, %v652
        %v1159 = vpack.c.bf16 %v663, %v660
        %v1160 = vpack.c.bf16 %v671, %v668
        %v1161 = vpack.c.bf16 %v679, %v676
        %v1162 = vpack.c.bf16 %v687, %v684
        %v1163 = vpack.c.bf16 %v695, %v692
        %v1164 = vpack.c.bf16 %v703, %v700
        %v1165 = vpack.c.bf16 %v711, %v708
        %v1166 = vpack.c.bf16 %v719, %v716
        %v1167 = vpack.c.bf16 %v727, %v724
        %v1168 = vpack.c.bf16 %v869, %v866
        %v1169 = vpack.c.bf16 %v877, %v874
        %v1170 = vpack.c.bf16 %v885, %v882
        %v1171 = vpack.c.bf16 %v893, %v890
        %v1172 = vpack.c.bf16 %v901, %v898
        %v1173 = vpack.c.bf16 %v909, %v906
        %v1174 = vpack.c.bf16 %v917, %v914
        %v1175 = vpack.c.bf16 %v925, %v922
        %v1176 = vpack.c.bf16 %v933, %v930
        %v1177 = vpack.c.bf16 %v941, %v938
        %v1178 = vpack.c.bf16 %v1083, %v1080
        %v1179 = vpack.c.bf16 %v1091, %v1088
        %v1180 = vpack.c.bf16 %v1099, %v1096
        %v1181 = vpack.c.bf16 %v1107, %v1104
        %v1182 = vpack.c.bf16 %v1115, %v1112
        %v1183 = vpack.c.bf16 %v1123, %v1120
        %v1184 = vpack.c.bf16 %v1131, %v1128
        %v1185 = vpack.c.bf16 %v1139, %v1136
        %v1186 = vpack.c.bf16 %v1147, %v1144
        %v1187 = vpack.c.bf16 %v1155, %v1152
        %1188 = vmatprep.subr.bf16.mxu0 0
        %1189 = vmatpush1.bf16.xpose.msra.mxu0 %v1168
        %1190 = vmatprep.subr.bf16.mxu0 0
        %1191 = vmatpush1.bf16.xpose.msra.mxu0 %v1169
        %1192 = vmatprep.subr.bf16.mxu0 0
        %1193 = vmatpush1.bf16.xpose.msra.mxu0 0
        %1194 = vmatprep.subr.bf16.mxu0 0
        %1195 = vmatpush1.bf16.xpose.msra.mxu0 0
        %1196 = vmatprep.subr.bf16.mxu0 0
        %1197 = vmatpush1.bf16.xpose.msra.mxu0 0
        %1198 = vmatprep.subr.bf16.mxu0 0
        %1199 = vmatpush1.bf16.xpose.msra.mxu0 0
        %1200 = vmatprep.subr.bf16.mxu0 0
        %1201 = vmatpush1.bf16.xpose.msra.mxu0 0
        %1202 = vmatprep.subr.bf16.mxu0 0
        %1203 = vmatpush1.bf16.xpose.msra.mxu0 0
        %1204 = vmatprep.subr.bf16.mxu0 0
        %1205 = vmatpush1.bf16.xpose.msra.mxu0 0
        %1206 = vmatprep.subr.bf16.mxu0 0
        %1207 = vmatpush1.bf16.xpose.msra.mxu0 0
        %1208 = vmatprep.subr.bf16.mxu0 0
        %1209 = vmatpush1.bf16.xpose.msra.mxu0 0
        %1210 = vmatprep.subr.bf16.mxu0 0
        %1211 = vmatpush1.bf16.xpose.msra.mxu0 0
        %1212 = vmatprep.subr.bf16.mxu0 0
        %1213 = vmatpush1.bf16.xpose.msra.mxu0 0
        %1214 = vmatprep.subr.bf16.mxu0 0
        %1215 = vmatpush1.bf16.xpose.msra.mxu0 0
        %1216 = vmatprep.subr.bf16.mxu0 0
        %1217 = vmatpush1.bf16.xpose.msra.mxu0 0
        %1218 = vmatprep.subr.bf16.mxu0 0
        %1219 = vmatpush1.bf16.xpose.msra.mxu0 0
        %1220 = vmatprep.mubr.bf16.mxu0 0
        %1221 = vmatmul.mubr.bf16.gmra.mrb[0].mxu0 %v1158
        %v1222 = vpop.f32.mrb[0].mxu0
        %v1223 = vadd.f32 0.0, %v1222
        %v1224 = vpop.f32.mrb[0].mxu0
        %v1225 = vpop.f32.mrb[0].mxu0
        %v1226 = vadd.f32 0.0, %v1225
        %v1227 = vpop.f32.mrb[0].mxu0
        %1228 = vmatprep.mubr.bf16.mxu0 0
        %1229 = vmatmul.mubr.bf16.gmra.mrb[0].mxu0 %v1159
        %v1230 = vpop.f32.mrb[0].mxu0
        %v1231 = vadd.f32 0.0, %v1230
        %v1232 = vpop.f32.mrb[0].mxu0
        %v1233 = vpop.f32.mrb[0].mxu0
        %v1234 = vadd.f32 0.0, %v1233
        %v1235 = vpop.f32.mrb[0].mxu0
        %1236 = vdwg.mxu0
        %vm1237 = vcmask 261120
        %v1238 = vsel %vm1237, %v1223, -inf
        %1239 = vmax.xlane.f32.xlu0 %v1238
        %v1240 = vpop.xlane.xlu0 %1239
        %v1241 = vsel %vm1237, %v1226, -inf
        %1242 = vmax.xlane.f32.xlu0 %v1241
        %v1243 = vpop.xlane.xlu0 %1242
        %v1244 = vsel %vm1237, %v1231, -inf
        %1245 = vmax.xlane.f32.xlu0 %v1244
        %v1246 = vpop.xlane.xlu0 %1245
        %v1247 = vsel %vm1237, %v1234, -inf
        %1248 = vmax.xlane.f32.xlu0 %v1247
        %v1249 = vpop.xlane.xlu0 %1248
        %v1250 = vsub.f32 %v1223, %v1240
        %v1251 = vsub.f32 %v1226, %v1243
        %v1252 = vsub.f32 %v1231, %v1246
        %v1253 = vsub.f32 %v1234, %v1249
        %v1254 = vmul.f32 %v1250, 1.442695
        %v1255 = vpow.pop %v1254
        %v1256 = vmul.f32 %v1251, 1.442695
        %v1257 = vpow.pop %v1256
        %v1258 = vmul.f32 %v1252, 1.442695
        %v1259 = vpow.pop %v1258
        %v1260 = vmul.f32 %v1253, 1.442695
        %v1261 = vpow.pop %v1260
        %v1262 = vsel %vm1237, %v1255, 0.0
        %1263 = vadd.xlane.f32.xlu0 %v1262
        %v1264 = vpop.xlane.xlu0 %1263
        %v1265 = vsel %vm1237, %v1257, 0.0
        %1266 = vadd.xlane.f32.xlu0 %v1265
        %v1267 = vpop.xlane.xlu0 %1266
        %v1268 = vsel %vm1237, %v1259, 0.0
        %1269 = vadd.xlane.f32.xlu0 %v1268
        %v1270 = vpop.xlane.xlu0 %1269
        %v1271 = vsel %vm1237, %v1261, 0.0
        %1272 = vadd.xlane.f32.xlu0 %v1271
        %v1273 = vpop.xlane.xlu0 %1272
        %v1274 = vrcp.pop %v1264
        %v1275 = vrcp.pop %v1267
        %v1276 = vrcp.pop %v1270
        %v1277 = vrcp.pop %v1273
        %v1278 = vmul.f32 %v1255, %v1274
        %v1279 = vmul.f32 %v1257, %v1275
        %v1280 = vmul.f32 %v1259, %v1276
        %v1281 = vmul.f32 %v1261, %v1277
        %v1282 = vpack.c.bf16 %v1279, %v1278
        %v1283 = vpack.c.bf16 %v1281, %v1280
        %v1285 = vsel %vm1237, %v1282, 0
        %v1288 = vsel %vm1237, %v1283, 0
        %1290 = vmatprep.subr.bf16.mxu0 0
        %1291 = vmatpush1.bf16.msra.mxu0 %v1178
        %1292 = vmatprep.subr.bf16.mxu0 0
        %1293 = vmatpush1.bf16.msra.mxu0 %v1179
        %1294 = vmatprep.subr.bf16.mxu0 0
        %1295 = vmatpush1.bf16.msra.mxu0 0
        %1296 = vmatprep.subr.bf16.mxu0 0
        %1297 = vmatpush1.bf16.msra.mxu0 0
        %1298 = vmatprep.subr.bf16.mxu0 0
        %1299 = vmatpush1.bf16.msra.mxu0 0
        %1300 = vmatprep.subr.bf16.mxu0 0
        %1301 = vmatpush1.bf16.msra.mxu0 0
        %1302 = vmatprep.subr.bf16.mxu0 0
        %1303 = vmatpush1.bf16.msra.mxu0 0
        %1304 = vmatprep.subr.bf16.mxu0 0
        %1305 = vmatpush1.bf16.msra.mxu0 0
        %1306 = vmatprep.subr.bf16.mxu0 0
        %1307 = vmatpush1.bf16.msra.mxu0 0
        %1308 = vmatprep.subr.bf16.mxu0 0
        %1309 = vmatpush1.bf16.msra.mxu0 0
        %1310 = vmatprep.subr.bf16.mxu0 0
        %1311 = vmatpush1.bf16.msra.mxu0 0
        %1312 = vmatprep.subr.bf16.mxu0 0
        %1313 = vmatpush1.bf16.msra.mxu0 0
        %1314 = vmatprep.subr.bf16.mxu0 0
        %1315 = vmatpush1.bf16.msra.mxu0 0
        %1316 = vmatprep.subr.bf16.mxu0 0
        %1317 = vmatpush1.bf16.msra.mxu0 0
        %1318 = vmatprep.subr.bf16.mxu0 0
        %1319 = vmatpush1.bf16.msra.mxu0 0
        %1320 = vmatprep.subr.bf16.mxu0 0
        %1321 = vmatpush1.bf16.msra.mxu0 0
        %1322 = vmatprep.mubr.bf16.mxu0 0
        %1323 = vmatmul.mubr.bf16.gmra.mrb[0].mxu0 %v1285
        %v1324 = vpop.f32.mrb[0].mxu0
        %v1325 = vadd.f32 0.0, %v1324
        %v1326 = vpop.f32.mrb[0].mxu0
        %v1327 = vpop.f32.mrb[0].mxu0
        %v1328 = vadd.f32 0.0, %v1327
        %v1329 = vpop.f32.mrb[0].mxu0
        %1330 = vmatprep.mubr.bf16.mxu0 0
        %1331 = vmatmul.mubr.bf16.gmra.mrb[0].mxu0 %v1288
        %v1332 = vpop.f32.mrb[0].mxu0
        %v1333 = vadd.f32 0.0, %v1332
        %v1334 = vpop.f32.mrb[0].mxu0
        %v1335 = vpop.f32.mrb[0].mxu0
        %v1336 = vadd.f32 0.0, %v1335
        %v1337 = vpop.f32.mrb[0].mxu0
        %1338 = vdwg.mxu0
        %1339 = vst [vmem:[%s502] sm:$0xff] %v1325
        %1340 = vst [vmem:[%s502 + $0x8] sm:$0xff] %v1328
        %1341 = vst [vmem:[%s502 + $0x10] sm:$0xff] %v1333
        %1342 = vst [vmem:[%s502 + $0x18] sm:$0xff] %v1336
        %1343 = vst.msk [vmem:[%s509] sm:$0xff] %vm1237, %v1278
        %1344 = vst.msk [vmem:[%s509 + $0x8] sm:$0xff] %vm1237, %v1279
        %1345 = vst.msk [vmem:[%s509 + $0x10] sm:$0xff] %vm1237, %v1280
        %1346 = vst.msk [vmem:[%s509 + $0x18] sm:$0xff] %vm1237, %v1281
        %1347 = vmatprep.subr.bf16.mxu0 0
        %1348 = vmatpush1.bf16.xpose.msra.mxu0 %v1170
        %1349 = vmatprep.subr.bf16.mxu0 0
        %1350 = vmatpush1.bf16.xpose.msra.mxu0 %v1171
        %1351 = vmatprep.subr.bf16.mxu0 0
        %1352 = vmatpush1.bf16.xpose.msra.mxu0 0
        %1353 = vmatprep.subr.bf16.mxu0 0
        %1354 = vmatpush1.bf16.xpose.msra.mxu0 0
        %1355 = vmatprep.subr.bf16.mxu0 0
        %1356 = vmatpush1.bf16.xpose.msra.mxu0 0
        %1357 = vmatprep.subr.bf16.mxu0 0
        %1358 = vmatpush1.bf16.xpose.msra.mxu0 0
        %1359 = vmatprep.subr.bf16.mxu0 0
        %1360 = vmatpush1.bf16.xpose.msra.mxu0 0
        %1361 = vmatprep.subr.bf16.mxu0 0
        %1362 = vmatpush1.bf16.xpose.msra.mxu0 0
        %1363 = vmatprep.subr.bf16.mxu0 0
        %1364 = vmatpush1.bf16.xpose.msra.mxu0 0
        %1365 = vmatprep.subr.bf16.mxu0 0
        %1366 = vmatpush1.bf16.xpose.msra.mxu0 0
        %1367 = vmatprep.subr.bf16.mxu0 0
        %1368 = vmatpush1.bf16.xpose.msra.mxu0 0
        %1369 = vmatprep.subr.bf16.mxu0 0
        %1370 = vmatpush1.bf16.xpose.msra.mxu0 0
        %1371 = vmatprep.subr.bf16.mxu0 0
        %1372 = vmatpush1.bf16.xpose.msra.mxu0 0
        %1373 = vmatprep.subr.bf16.mxu0 0
        %1374 = vmatpush1.bf16.xpose.msra.mxu0 0
        %1375 = vmatprep.subr.bf16.mxu0 0
        %1376 = vmatpush1.bf16.xpose.msra.mxu0 0
        %1377 = vmatprep.subr.bf16.mxu0 0
        %1378 = vmatpush1.bf16.xpose.msra.mxu0 0
        %1379 = vmatprep.mubr.bf16.mxu0 0
        %1380 = vmatmul.mubr.bf16.gmra.mrb[0].mxu0 %v1160
        %v1381 = vpop.f32.mrb[0].mxu0
        %v1382 = vadd.f32 0.0, %v1381
        %v1383 = vpop.f32.mrb[0].mxu0
        %v1384 = vpop.f32.mrb[0].mxu0
        %v1385 = vadd.f32 0.0, %v1384
        %v1386 = vpop.f32.mrb[0].mxu0
        %1387 = vmatprep.mubr.bf16.mxu0 0
        %1388 = vmatmul.mubr.bf16.gmra.mrb[0].mxu0 %v1161
        %v1389 = vpop.f32.mrb[0].mxu0
        %v1390 = vadd.f32 0.0, %v1389
        %v1391 = vpop.f32.mrb[0].mxu0
        %v1392 = vpop.f32.mrb[0].mxu0
        %v1393 = vadd.f32 0.0, %v1392
        %v1394 = vpop.f32.mrb[0].mxu0
        %1395 = vdwg.mxu0
        %v1396 = vsel %vm1237, %v1382, -inf
        %1397 = vmax.xlane.f32.xlu0 %v1396
        %v1398 = vpop.xlane.xlu0 %1397
        %v1399 = vsel %vm1237, %v1385, -inf
        %1400 = vmax.xlane.f32.xlu0 %v1399
        %v1401 = vpop.xlane.xlu0 %1400
        %v1402 = vsel %vm1237, %v1390, -inf
        %1403 = vmax.xlane.f32.xlu0 %v1402
        %v1404 = vpop.xlane.xlu0 %1403
        %v1405 = vsel %vm1237, %v1393, -inf
        %1406 = vmax.xlane.f32.xlu0 %v1405
        %v1407 = vpop.xlane.xlu0 %1406
        %v1408 = vsub.f32 %v1382, %v1398
        %v1409 = vsub.f32 %v1385, %v1401
        %v1410 = vsub.f32 %v1390, %v1404
        %v1411 = vsub.f32 %v1393, %v1407
        %v1412 = vmul.f32 %v1408, 1.442695
        %v1413 = vpow.pop %v1412
        %v1414 = vmul.f32 %v1409, 1.442695
        %v1415 = vpow.pop %v1414
        %v1416 = vmul.f32 %v1410, 1.442695
        %v1417 = vpow.pop %v1416
        %v1418 = vmul.f32 %v1411, 1.442695
        %v1419 = vpow.pop %v1418
        %v1420 = vsel %vm1237, %v1413, 0.0
        %1421 = vadd.xlane.f32.xlu0 %v1420
        %v1422 = vpop.xlane.xlu0 %1421
        %v1423 = vsel %vm1237, %v1415, 0.0
        %1424 = vadd.xlane.f32.xlu0 %v1423
        %v1425 = vpop.xlane.xlu0 %1424
        %v1426 = vsel %vm1237, %v1417, 0.0
        %1427 = vadd.xlane.f32.xlu0 %v1426
        %v1428 = vpop.xlane.xlu0 %1427
        %v1429 = vsel %vm1237, %v1419, 0.0
        %1430 = vadd.xlane.f32.xlu0 %v1429
        %v1431 = vpop.xlane.xlu0 %1430
        %v1432 = vrcp.pop %v1422
        %v1433 = vrcp.pop %v1425
        %v1434 = vrcp.pop %v1428
        %v1435 = vrcp.pop %v1431
        %v1436 = vmul.f32 %v1413, %v1432
        %v1437 = vmul.f32 %v1415, %v1433
        %v1438 = vmul.f32 %v1417, %v1434
        %v1439 = vmul.f32 %v1419, %v1435
        %v1440 = vpack.c.bf16 %v1437, %v1436
        %v1441 = vpack.c.bf16 %v1439, %v1438
        %v1443 = vsel %vm1237, %v1440, 0
        %v1446 = vsel %vm1237, %v1441, 0
        %1448 = vmatprep.subr.bf16.mxu0 0
        %1449 = vmatpush1.bf16.msra.mxu0 %v1180
        %1450 = vmatprep.subr.bf16.mxu0 0
        %1451 = vmatpush1.bf16.msra.mxu0 %v1181
        %1452 = vmatprep.subr.bf16.mxu0 0
        %1453 = vmatpush1.bf16.msra.mxu0 0
        %1454 = vmatprep.subr.bf16.mxu0 0
        %1455 = vmatpush1.bf16.msra.mxu0 0
        %1456 = vmatprep.subr.bf16.mxu0 0
        %1457 = vmatpush1.bf16.msra.mxu0 0
        %1458 = vmatprep.subr.bf16.mxu0 0
        %1459 = vmatpush1.bf16.msra.mxu0 0
        %1460 = vmatprep.subr.bf16.mxu0 0
        %1461 = vmatpush1.bf16.msra.mxu0 0
        %1462 = vmatprep.subr.bf16.mxu0 0
        %1463 = vmatpush1.bf16.msra.mxu0 0
        %1464 = vmatprep.subr.bf16.mxu0 0
        %1465 = vmatpush1.bf16.msra.mxu0 0
        %1466 = vmatprep.subr.bf16.mxu0 0
        %1467 = vmatpush1.bf16.msra.mxu0 0
        %1468 = vmatprep.subr.bf16.mxu0 0
        %1469 = vmatpush1.bf16.msra.mxu0 0
        %1470 = vmatprep.subr.bf16.mxu0 0
        %1471 = vmatpush1.bf16.msra.mxu0 0
        %1472 = vmatprep.subr.bf16.mxu0 0
        %1473 = vmatpush1.bf16.msra.mxu0 0
        %1474 = vmatprep.subr.bf16.mxu0 0
        %1475 = vmatpush1.bf16.msra.mxu0 0
        %1476 = vmatprep.subr.bf16.mxu0 0
        %1477 = vmatpush1.bf16.msra.mxu0 0
        %1478 = vmatprep.subr.bf16.mxu0 0
        %1479 = vmatpush1.bf16.msra.mxu0 0
        %1480 = vmatprep.mubr.bf16.mxu0 0
        %1481 = vmatmul.mubr.bf16.gmra.mrb[0].mxu0 %v1443
        %v1482 = vpop.f32.mrb[0].mxu0
        %v1483 = vadd.f32 0.0, %v1482
        %v1484 = vpop.f32.mrb[0].mxu0
        %v1485 = vpop.f32.mrb[0].mxu0
        %v1486 = vadd.f32 0.0, %v1485
        %v1487 = vpop.f32.mrb[0].mxu0
        %1488 = vmatprep.mubr.bf16.mxu0 0
        %1489 = vmatmul.mubr.bf16.gmra.mrb[0].mxu0 %v1446
        %v1490 = vpop.f32.mrb[0].mxu0
        %v1491 = vadd.f32 0.0, %v1490
        %v1492 = vpop.f32.mrb[0].mxu0
        %v1493 = vpop.f32.mrb[0].mxu0
        %v1494 = vadd.f32 0.0, %v1493
        %v1495 = vpop.f32.mrb[0].mxu0
        %1496 = vdwg.mxu0
        %1497 = vst [vmem:[%s502 + $0x20] sm:$0xff] %v1483
        %1498 = vst [vmem:[%s502 + $0x28] sm:$0xff] %v1486
        %1499 = vst [vmem:[%s502 + $0x30] sm:$0xff] %v1491
        %1500 = vst [vmem:[%s502 + $0x38] sm:$0xff] %v1494
        %s1501 = scalar_lea.vmem %s509, 32 [#allocation14]
        %1502 = vst.msk [vmem:[%s1501] sm:$0xff] %vm1237, %v1436
        %1503 = vst.msk [vmem:[%s1501 + $0x8] sm:$0xff] %vm1237, %v1437
        %1504 = vst.msk [vmem:[%s1501 + $0x10] sm:$0xff] %vm1237, %v1438
        %1505 = vst.msk [vmem:[%s1501 + $0x18] sm:$0xff] %vm1237, %v1439
        %1506 = vmatprep.subr.bf16.mxu0 0
        %1507 = vmatpush1.bf16.xpose.msra.mxu0 %v1172
        %1508 = vmatprep.subr.bf16.mxu0 0
        %1509 = vmatpush1.bf16.xpose.msra.mxu0 %v1173
        %1510 = vmatprep.subr.bf16.mxu0 0
        %1511 = vmatpush1.bf16.xpose.msra.mxu0 0
        %1512 = vmatprep.subr.bf16.mxu0 0
        %1513 = vmatpush1.bf16.xpose.msra.mxu0 0
        %1514 = vmatprep.subr.bf16.mxu0 0
        %1515 = vmatpush1.bf16.xpose.msra.mxu0 0
        %1516 = vmatprep.subr.bf16.mxu0 0
        %1517 = vmatpush1.bf16.xpose.msra.mxu0 0
        %1518 = vmatprep.subr.bf16.mxu0 0
        %1519 = vmatpush1.bf16.xpose.msra.mxu0 0
        %1520 = vmatprep.subr.bf16.mxu0 0
        %1521 = vmatpush1.bf16.xpose.msra.mxu0 0
        %1522 = vmatprep.subr.bf16.mxu0 0
        %1523 = vmatpush1.bf16.xpose.msra.mxu0 0
        %1524 = vmatprep.subr.bf16.mxu0 0
        %1525 = vmatpush1.bf16.xpose.msra.mxu0 0
        %1526 = vmatprep.subr.bf16.mxu0 0
        %1527 = vmatpush1.bf16.xpose.msra.mxu0 0
        %1528 = vmatprep.subr.bf16.mxu0 0
        %1529 = vmatpush1.bf16.xpose.msra.mxu0 0
        %1530 = vmatprep.subr.bf16.mxu0 0
        %1531 = vmatpush1.bf16.xpose.msra.mxu0 0
        %1532 = vmatprep.subr.bf16.mxu0 0
        %1533 = vmatpush1.bf16.xpose.msra.mxu0 0
        %1534 = vmatprep.subr.bf16.mxu0 0
        %1535 = vmatpush1.bf16.xpose.msra.mxu0 0
        %1536 = vmatprep.subr.bf16.mxu0 0
        %1537 = vmatpush1.bf16.xpose.msra.mxu0 0
        %1538 = vmatprep.mubr.bf16.mxu0 0
        %1539 = vmatmul.mubr.bf16.gmra.mrb[0].mxu0 %v1162
        %v1540 = vpop.f32.mrb[0].mxu0
        %v1541 = vadd.f32 0.0, %v1540
        %v1542 = vpop.f32.mrb[0].mxu0
        %v1543 = vpop.f32.mrb[0].mxu0
        %v1544 = vadd.f32 0.0, %v1543
        %v1545 = vpop.f32.mrb[0].mxu0
        %1546 = vmatprep.mubr.bf16.mxu0 0
        %1547 = vmatmul.mubr.bf16.gmra.mrb[0].mxu0 %v1163
        %v1548 = vpop.f32.mrb[0].mxu0
        %v1549 = vadd.f32 0.0, %v1548
        %v1550 = vpop.f32.mrb[0].mxu0
        %v1551 = vpop.f32.mrb[0].mxu0
        %v1552 = vadd.f32 0.0, %v1551
        %v1553 = vpop.f32.mrb[0].mxu0
        %1554 = vdwg.mxu0
        %v1555 = vsel %vm1237, %v1541, -inf
        %1556 = vmax.xlane.f32.xlu0 %v1555
        %v1557 = vpop.xlane.xlu0 %1556
        %v1558 = vsel %vm1237, %v1544, -inf
        %1559 = vmax.xlane.f32.xlu0 %v1558
        %v1560 = vpop.xlane.xlu0 %1559
        %v1561 = vsel %vm1237, %v1549, -inf
        %1562 = vmax.xlane.f32.xlu0 %v1561
        %v1563 = vpop.xlane.xlu0 %1562
        %v1564 = vsel %vm1237, %v1552, -inf
        %1565 = vmax.xlane.f32.xlu0 %v1564
        %v1566 = vpop.xlane.xlu0 %1565
        %v1567 = vsub.f32 %v1541, %v1557
        %v1568 = vsub.f32 %v1544, %v1560
        %v1569 = vsub.f32 %v1549, %v1563
        %v1570 = vsub.f32 %v1552, %v1566
        %v1571 = vmul.f32 %v1567, 1.442695
        %v1572 = vpow.pop %v1571
        %v1573 = vmul.f32 %v1568, 1.442695
        %v1574 = vpow.pop %v1573
        %v1575 = vmul.f32 %v1569, 1.442695
        %v1576 = vpow.pop %v1575
        %v1577 = vmul.f32 %v1570, 1.442695
        %v1578 = vpow.pop %v1577
        %v1579 = vsel %vm1237, %v1572, 0.0
        %1580 = vadd.xlane.f32.xlu0 %v1579
        %v1581 = vpop.xlane.xlu0 %1580
        %v1582 = vsel %vm1237, %v1574, 0.0
        %1583 = vadd.xlane.f32.xlu0 %v1582
        %v1584 = vpop.xlane.xlu0 %1583
        %v1585 = vsel %vm1237, %v1576, 0.0
        %1586 = vadd.xlane.f32.xlu0 %v1585
        %v1587 = vpop.xlane.xlu0 %1586
        %v1588 = vsel %vm1237, %v1578, 0.0
        %1589 = vadd.xlane.f32.xlu0 %v1588
        %v1590 = vpop.xlane.xlu0 %1589
        %v1591 = vrcp.pop %v1581
        %v1592 = vrcp.pop %v1584
        %v1593 = vrcp.pop %v1587
        %v1594 = vrcp.pop %v1590
        %v1595 = vmul.f32 %v1572, %v1591
        %v1596 = vmul.f32 %v1574, %v1592
        %v1597 = vmul.f32 %v1576, %v1593
        %v1598 = vmul.f32 %v1578, %v1594
        %v1599 = vpack.c.bf16 %v1596, %v1595
        %v1600 = vpack.c.bf16 %v1598, %v1597
        %v1602 = vsel %vm1237, %v1599, 0
        %v1605 = vsel %vm1237, %v1600, 0
        %1607 = vmatprep.subr.bf16.mxu0 0
        %1608 = vmatpush1.bf16.msra.mxu0 %v1182
        %1609 = vmatprep.subr.bf16.mxu0 0
        %1610 = vmatpush1.bf16.msra.mxu0 %v1183
        %1611 = vmatprep.subr.bf16.mxu0 0
        %1612 = vmatpush1.bf16.msra.mxu0 0
        %1613 = vmatprep.subr.bf16.mxu0 0
        %1614 = vmatpush1.bf16.msra.mxu0 0
        %1615 = vmatprep.subr.bf16.mxu0 0
        %1616 = vmatpush1.bf16.msra.mxu0 0
        %1617 = vmatprep.subr.bf16.mxu0 0
        %1618 = vmatpush1.bf16.msra.mxu0 0
        %1619 = vmatprep.subr.bf16.mxu0 0
        %1620 = vmatpush1.bf16.msra.mxu0 0
        %1621 = vmatprep.subr.bf16.mxu0 0
        %1622 = vmatpush1.bf16.msra.mxu0 0
        %1623 = vmatprep.subr.bf16.mxu0 0
        %1624 = vmatpush1.bf16.msra.mxu0 0
        %1625 = vmatprep.subr.bf16.mxu0 0
        %1626 = vmatpush1.bf16.msra.mxu0 0
        %1627 = vmatprep.subr.bf16.mxu0 0
        %1628 = vmatpush1.bf16.msra.mxu0 0
        %1629 = vmatprep.subr.bf16.mxu0 0
        %1630 = vmatpush1.bf16.msra.mxu0 0
        %1631 = vmatprep.subr.bf16.mxu0 0
        %1632 = vmatpush1.bf16.msra.mxu0 0
        %1633 = vmatprep.subr.bf16.mxu0 0
        %1634 = vmatpush1.bf16.msra.mxu0 0
        %1635 = vmatprep.subr.bf16.mxu0 0
        %1636 = vmatpush1.bf16.msra.mxu0 0
        %1637 = vmatprep.subr.bf16.mxu0 0
        %1638 = vmatpush1.bf16.msra.mxu0 0
        %1639 = vmatprep.mubr.bf16.mxu0 0
        %1640 = vmatmul.mubr.bf16.gmra.mrb[0].mxu0 %v1602
        %v1641 = vpop.f32.mrb[0].mxu0
        %v1642 = vadd.f32 0.0, %v1641
        %v1643 = vpop.f32.mrb[0].mxu0
        %v1644 = vpop.f32.mrb[0].mxu0
        %v1645 = vadd.f32 0.0, %v1644
        %v1646 = vpop.f32.mrb[0].mxu0
        %1647 = vmatprep.mubr.bf16.mxu0 0
        %1648 = vmatmul.mubr.bf16.gmra.mrb[0].mxu0 %v1605
        %v1649 = vpop.f32.mrb[0].mxu0
        %v1650 = vadd.f32 0.0, %v1649
        %v1651 = vpop.f32.mrb[0].mxu0
        %v1652 = vpop.f32.mrb[0].mxu0
        %v1653 = vadd.f32 0.0, %v1652
        %v1654 = vpop.f32.mrb[0].mxu0
        %1655 = vdwg.mxu0
        %1656 = vst [vmem:[%s502 + $0x40] sm:$0xff] %v1642
        %1657 = vst [vmem:[%s502 + $0x48] sm:$0xff] %v1645
        %1658 = vst [vmem:[%s502 + $0x50] sm:$0xff] %v1650
        %1659 = vst [vmem:[%s502 + $0x58] sm:$0xff] %v1653
        %s1660 = scalar_lea.vmem %s509, 64 [#allocation14]
        %1661 = vst.msk [vmem:[%s1660] sm:$0xff] %vm1237, %v1595
        %1662 = vst.msk [vmem:[%s1660 + $0x8] sm:$0xff] %vm1237, %v1596
        %1663 = vst.msk [vmem:[%s1660 + $0x10] sm:$0xff] %vm1237, %v1597
        %1664 = vst.msk [vmem:[%s1660 + $0x18] sm:$0xff] %vm1237, %v1598
        %1665 = vmatprep.subr.bf16.mxu0 0
        %1666 = vmatpush1.bf16.xpose.msra.mxu0 %v1174
        %1667 = vmatprep.subr.bf16.mxu0 0
        %1668 = vmatpush1.bf16.xpose.msra.mxu0 %v1175
        %1669 = vmatprep.subr.bf16.mxu0 0
        %1670 = vmatpush1.bf16.xpose.msra.mxu0 0
        %1671 = vmatprep.subr.bf16.mxu0 0
        %1672 = vmatpush1.bf16.xpose.msra.mxu0 0
        %1673 = vmatprep.subr.bf16.mxu0 0
        %1674 = vmatpush1.bf16.xpose.msra.mxu0 0
        %1675 = vmatprep.subr.bf16.mxu0 0
        %1676 = vmatpush1.bf16.xpose.msra.mxu0 0
        %1677 = vmatprep.subr.bf16.mxu0 0
        %1678 = vmatpush1.bf16.xpose.msra.mxu0 0
        %1679 = vmatprep.subr.bf16.mxu0 0
        %1680 = vmatpush1.bf16.xpose.msra.mxu0 0
        %1681 = vmatprep.subr.bf16.mxu0 0
        %1682 = vmatpush1.bf16.xpose.msra.mxu0 0
        %1683 = vmatprep.subr.bf16.mxu0 0
        %1684 = vmatpush1.bf16.xpose.msra.mxu0 0
        %1685 = vmatprep.subr.bf16.mxu0 0
        %1686 = vmatpush1.bf16.xpose.msra.mxu0 0
        %1687 = vmatprep.subr.bf16.mxu0 0
        %1688 = vmatpush1.bf16.xpose.msra.mxu0 0
        %1689 = vmatprep.subr.bf16.mxu0 0
        %1690 = vmatpush1.bf16.xpose.msra.mxu0 0
        %1691 = vmatprep.subr.bf16.mxu0 0
        %1692 = vmatpush1.bf16.xpose.msra.mxu0 0
        %1693 = vmatprep.subr.bf16.mxu0 0
        %1694 = vmatpush1.bf16.xpose.msra.mxu0 0
        %1695 = vmatprep.subr.bf16.mxu0 0
        %1696 = vmatpush1.bf16.xpose.msra.mxu0 0
        %1697 = vmatprep.mubr.bf16.mxu0 0
        %1698 = vmatmul.mubr.bf16.gmra.mrb[0].mxu0 %v1164
        %v1699 = vpop.f32.mrb[0].mxu0
        %v1700 = vadd.f32 0.0, %v1699
        %v1701 = vpop.f32.mrb[0].mxu0
        %v1702 = vpop.f32.mrb[0].mxu0
        %v1703 = vadd.f32 0.0, %v1702
        %v1704 = vpop.f32.mrb[0].mxu0
        %1705 = vmatprep.mubr.bf16.mxu0 0
        %1706 = vmatmul.mubr.bf16.gmra.mrb[0].mxu0 %v1165
        %v1707 = vpop.f32.mrb[0].mxu0
        %v1708 = vadd.f32 0.0, %v1707
        %v1709 = vpop.f32.mrb[0].mxu0
        %v1710 = vpop.f32.mrb[0].mxu0
        %v1711 = vadd.f32 0.0, %v1710
        %v1712 = vpop.f32.mrb[0].mxu0
        %1713 = vdwg.mxu0
        %v1714 = vsel %vm1237, %v1700, -inf
        %1715 = vmax.xlane.f32.xlu0 %v1714
        %v1716 = vpop.xlane.xlu0 %1715
        %v1717 = vsel %vm1237, %v1703, -inf
        %1718 = vmax.xlane.f32.xlu0 %v1717
        %v1719 = vpop.xlane.xlu0 %1718
        %v1720 = vsel %vm1237, %v1708, -inf
        %1721 = vmax.xlane.f32.xlu0 %v1720
        %v1722 = vpop.xlane.xlu0 %1721
        %v1723 = vsel %vm1237, %v1711, -inf
        %1724 = vmax.xlane.f32.xlu0 %v1723
        %v1725 = vpop.xlane.xlu0 %1724
        %v1726 = vsub.f32 %v1700, %v1716
        %v1727 = vsub.f32 %v1703, %v1719
        %v1728 = vsub.f32 %v1708, %v1722
        %v1729 = vsub.f32 %v1711, %v1725
        %v1730 = vmul.f32 %v1726, 1.442695
        %v1731 = vpow.pop %v1730
        %v1732 = vmul.f32 %v1727, 1.442695
        %v1733 = vpow.pop %v1732
        %v1734 = vmul.f32 %v1728, 1.442695
        %v1735 = vpow.pop %v1734
        %v1736 = vmul.f32 %v1729, 1.442695
        %v1737 = vpow.pop %v1736
        %v1738 = vsel %vm1237, %v1731, 0.0
        %1739 = vadd.xlane.f32.xlu0 %v1738
        %v1740 = vpop.xlane.xlu0 %1739
        %v1741 = vsel %vm1237, %v1733, 0.0
        %1742 = vadd.xlane.f32.xlu0 %v1741
        %v1743 = vpop.xlane.xlu0 %1742
        %v1744 = vsel %vm1237, %v1735, 0.0
        %1745 = vadd.xlane.f32.xlu0 %v1744
        %v1746 = vpop.xlane.xlu0 %1745
        %v1747 = vsel %vm1237, %v1737, 0.0
        %1748 = vadd.xlane.f32.xlu0 %v1747
        %v1749 = vpop.xlane.xlu0 %1748
        %v1750 = vrcp.pop %v1740
        %v1751 = vrcp.pop %v1743
        %v1752 = vrcp.pop %v1746
        %v1753 = vrcp.pop %v1749
        %v1754 = vmul.f32 %v1731, %v1750
        %v1755 = vmul.f32 %v1733, %v1751
        %v1756 = vmul.f32 %v1735, %v1752
        %v1757 = vmul.f32 %v1737, %v1753
        %v1758 = vpack.c.bf16 %v1755, %v1754
        %v1759 = vpack.c.bf16 %v1757, %v1756
        %v1761 = vsel %vm1237, %v1758, 0
        %v1764 = vsel %vm1237, %v1759, 0
        %1766 = vmatprep.subr.bf16.mxu0 0
        %1767 = vmatpush1.bf16.msra.mxu0 %v1184
        %1768 = vmatprep.subr.bf16.mxu0 0
        %1769 = vmatpush1.bf16.msra.mxu0 %v1185
        %1770 = vmatprep.subr.bf16.mxu0 0
        %1771 = vmatpush1.bf16.msra.mxu0 0
        %1772 = vmatprep.subr.bf16.mxu0 0
        %1773 = vmatpush1.bf16.msra.mxu0 0
        %1774 = vmatprep.subr.bf16.mxu0 0
        %1775 = vmatpush1.bf16.msra.mxu0 0
        %1776 = vmatprep.subr.bf16.mxu0 0
        %1777 = vmatpush1.bf16.msra.mxu0 0
        %1778 = vmatprep.subr.bf16.mxu0 0
        %1779 = vmatpush1.bf16.msra.mxu0 0
        %1780 = vmatprep.subr.bf16.mxu0 0
        %1781 = vmatpush1.bf16.msra.mxu0 0
        %1782 = vmatprep.subr.bf16.mxu0 0
        %1783 = vmatpush1.bf16.msra.mxu0 0
        %1784 = vmatprep.subr.bf16.mxu0 0
        %1785 = vmatpush1.bf16.msra.mxu0 0
        %1786 = vmatprep.subr.bf16.mxu0 0
        %1787 = vmatpush1.bf16.msra.mxu0 0
        %1788 = vmatprep.subr.bf16.mxu0 0
        %1789 = vmatpush1.bf16.msra.mxu0 0
        %1790 = vmatprep.subr.bf16.mxu0 0
        %1791 = vmatpush1.bf16.msra.mxu0 0
        %1792 = vmatprep.subr.bf16.mxu0 0
        %1793 = vmatpush1.bf16.msra.mxu0 0
        %1794 = vmatprep.subr.bf16.mxu0 0
        %1795 = vmatpush1.bf16.msra.mxu0 0
        %1796 = vmatprep.subr.bf16.mxu0 0
        %1797 = vmatpush1.bf16.msra.mxu0 0
        %1798 = vmatprep.mubr.bf16.mxu0 0
        %1799 = vmatmul.mubr.bf16.gmra.mrb[0].mxu0 %v1761
        %v1800 = vpop.f32.mrb[0].mxu0
        %v1801 = vadd.f32 0.0, %v1800
        %v1802 = vpop.f32.mrb[0].mxu0
        %v1803 = vpop.f32.mrb[0].mxu0
        %v1804 = vadd.f32 0.0, %v1803
        %v1805 = vpop.f32.mrb[0].mxu0
        %1806 = vmatprep.mubr.bf16.mxu0 0
        %1807 = vmatmul.mubr.bf16.gmra.mrb[0].mxu0 %v1764
        %v1808 = vpop.f32.mrb[0].mxu0
        %v1809 = vadd.f32 0.0, %v1808
        %v1810 = vpop.f32.mrb[0].mxu0
        %v1811 = vpop.f32.mrb[0].mxu0
        %v1812 = vadd.f32 0.0, %v1811
        %v1813 = vpop.f32.mrb[0].mxu0
        %1814 = vdwg.mxu0
        %1815 = vst [vmem:[%s502 + $0x60] sm:$0xff] %v1801
        %1816 = vst [vmem:[%s502 + $0x68] sm:$0xff] %v1804
        %1817 = vst [vmem:[%s502 + $0x70] sm:$0xff] %v1809
        %1818 = vst [vmem:[%s502 + $0x78] sm:$0xff] %v1812
        %s1819 = scalar_lea.vmem %s509, 96 [#allocation14]
        %1820 = vst.msk [vmem:[%s1819] sm:$0xff] %vm1237, %v1754
        %1821 = vst.msk [vmem:[%s1819 + $0x8] sm:$0xff] %vm1237, %v1755
        %1822 = vst.msk [vmem:[%s1819 + $0x10] sm:$0xff] %vm1237, %v1756
        %1823 = vst.msk [vmem:[%s1819 + $0x18] sm:$0xff] %vm1237, %v1757
        %1824 = vmatprep.subr.bf16.mxu0 0
        %1825 = vmatpush1.bf16.xpose.msra.mxu0 %v1176
        %1826 = vmatprep.subr.bf16.mxu0 0
        %1827 = vmatpush1.bf16.xpose.msra.mxu0 %v1177
        %1828 = vmatprep.subr.bf16.mxu0 0
        %1829 = vmatpush1.bf16.xpose.msra.mxu0 0
        %1830 = vmatprep.subr.bf16.mxu0 0
        %1831 = vmatpush1.bf16.xpose.msra.mxu0 0
        %1832 = vmatprep.subr.bf16.mxu0 0
        %1833 = vmatpush1.bf16.xpose.msra.mxu0 0
        %1834 = vmatprep.subr.bf16.mxu0 0
        %1835 = vmatpush1.bf16.xpose.msra.mxu0 0
        %1836 = vmatprep.subr.bf16.mxu0 0
        %1837 = vmatpush1.bf16.xpose.msra.mxu0 0
        %1838 = vmatprep.subr.bf16.mxu0 0
        %1839 = vmatpush1.bf16.xpose.msra.mxu0 0
        %1840 = vmatprep.subr.bf16.mxu0 0
        %1841 = vmatpush1.bf16.xpose.msra.mxu0 0
        %1842 = vmatprep.subr.bf16.mxu0 0
        %1843 = vmatpush1.bf16.xpose.msra.mxu0 0
        %1844 = vmatprep.subr.bf16.mxu0 0
        %1845 = vmatpush1.bf16.xpose.msra.mxu0 0
        %1846 = vmatprep.subr.bf16.mxu0 0
        %1847 = vmatpush1.bf16.xpose.msra.mxu0 0
        %1848 = vmatprep.subr.bf16.mxu0 0
        %1849 = vmatpush1.bf16.xpose.msra.mxu0 0
        %1850 = vmatprep.subr.bf16.mxu0 0
        %1851 = vmatpush1.bf16.xpose.msra.mxu0 0
        %1852 = vmatprep.subr.bf16.mxu0 0
        %1853 = vmatpush1.bf16.xpose.msra.mxu0 0
        %1854 = vmatprep.subr.bf16.mxu0 0
        %1855 = vmatpush1.bf16.xpose.msra.mxu0 0
        %1856 = vmatprep.mubr.bf16.mxu0 0
        %1857 = vmatmul.mubr.bf16.gmra.mrb[0].mxu0 %v1166
        %v1858 = vpop.f32.mrb[0].mxu0
        %v1859 = vadd.f32 0.0, %v1858
        %v1860 = vpop.f32.mrb[0].mxu0
        %v1861 = vpop.f32.mrb[0].mxu0
        %v1862 = vadd.f32 0.0, %v1861
        %v1863 = vpop.f32.mrb[0].mxu0
        %1864 = vmatprep.mubr.bf16.mxu0 0
        %1865 = vmatmul.mubr.bf16.gmra.mrb[0].mxu0 %v1167
        %v1866 = vpop.f32.mrb[0].mxu0
        %v1867 = vadd.f32 0.0, %v1866
        %v1868 = vpop.f32.mrb[0].mxu0
        %v1869 = vpop.f32.mrb[0].mxu0
        %v1870 = vadd.f32 0.0, %v1869
        %v1871 = vpop.f32.mrb[0].mxu0
        %1872 = vdwg.mxu0
        %v1873 = vsel %vm1237, %v1859, -inf
        %1874 = vmax.xlane.f32.xlu0 %v1873
        %v1875 = vpop.xlane.xlu0 %1874
        %v1876 = vsel %vm1237, %v1862, -inf
        %1877 = vmax.xlane.f32.xlu0 %v1876
        %v1878 = vpop.xlane.xlu0 %1877
        %v1879 = vsel %vm1237, %v1867, -inf
        %1880 = vmax.xlane.f32.xlu0 %v1879
        %v1881 = vpop.xlane.xlu0 %1880
        %v1882 = vsel %vm1237, %v1870, -inf
        %1883 = vmax.xlane.f32.xlu0 %v1882
        %v1884 = vpop.xlane.xlu0 %1883
        %v1885 = vsub.f32 %v1859, %v1875
        %v1886 = vsub.f32 %v1862, %v1878
        %v1887 = vsub.f32 %v1867, %v1881
        %v1888 = vsub.f32 %v1870, %v1884
        %v1889 = vmul.f32 %v1885, 1.442695
        %v1890 = vpow.pop %v1889
        %v1891 = vmul.f32 %v1886, 1.442695
        %v1892 = vpow.pop %v1891
        %v1893 = vmul.f32 %v1887, 1.442695
        %v1894 = vpow.pop %v1893
        %v1895 = vmul.f32 %v1888, 1.442695
        %v1896 = vpow.pop %v1895
        %v1897 = vsel %vm1237, %v1890, 0.0
        %1898 = vadd.xlane.f32.xlu0 %v1897
        %v1899 = vpop.xlane.xlu0 %1898
        %v1900 = vsel %vm1237, %v1892, 0.0
        %1901 = vadd.xlane.f32.xlu0 %v1900
        %v1902 = vpop.xlane.xlu0 %1901
        %v1903 = vsel %vm1237, %v1894, 0.0
        %1904 = vadd.xlane.f32.xlu0 %v1903
        %v1905 = vpop.xlane.xlu0 %1904
        %v1906 = vsel %vm1237, %v1896, 0.0
        %1907 = vadd.xlane.f32.xlu0 %v1906
        %v1908 = vpop.xlane.xlu0 %1907
        %v1909 = vrcp.pop %v1899
        %v1910 = vrcp.pop %v1902
        %v1911 = vrcp.pop %v1905
        %v1912 = vrcp.pop %v1908
        %v1913 = vmul.f32 %v1890, %v1909
        %v1914 = vmul.f32 %v1892, %v1910
        %v1915 = vmul.f32 %v1894, %v1911
        %v1916 = vmul.f32 %v1896, %v1912
        %v1917 = vpack.c.bf16 %v1914, %v1913
        %v1918 = vpack.c.bf16 %v1916, %v1915
        %v1920 = vsel %vm1237, %v1917, 0
        %v1923 = vsel %vm1237, %v1918, 0
        %1925 = vmatprep.subr.bf16.mxu0 0
        %1926 = vmatpush1.bf16.msra.mxu0 %v1186
        %1927 = vmatprep.subr.bf16.mxu0 0
        %1928 = vmatpush1.bf16.msra.mxu0 %v1187
        %1929 = vmatprep.subr.bf16.mxu0 0
        %1930 = vmatpush1.bf16.msra.mxu0 0
        %1931 = vmatprep.subr.bf16.mxu0 0
        %1932 = vmatpush1.bf16.msra.mxu0 0
        %1933 = vmatprep.subr.bf16.mxu0 0
        %1934 = vmatpush1.bf16.msra.mxu0 0
        %1935 = vmatprep.subr.bf16.mxu0 0
        %1936 = vmatpush1.bf16.msra.mxu0 0
        %1937 = vmatprep.subr.bf16.mxu0 0
        %1938 = vmatpush1.bf16.msra.mxu0 0
        %1939 = vmatprep.subr.bf16.mxu0 0
        %1940 = vmatpush1.bf16.msra.mxu0 0
        %1941 = vmatprep.subr.bf16.mxu0 0
        %1942 = vmatpush1.bf16.msra.mxu0 0
        %1943 = vmatprep.subr.bf16.mxu0 0
        %1944 = vmatpush1.bf16.msra.mxu0 0
        %1945 = vmatprep.subr.bf16.mxu0 0
        %1946 = vmatpush1.bf16.msra.mxu0 0
        %1947 = vmatprep.subr.bf16.mxu0 0
        %1948 = vmatpush1.bf16.msra.mxu0 0
        %1949 = vmatprep.subr.bf16.mxu0 0
        %1950 = vmatpush1.bf16.msra.mxu0 0
        %1951 = vmatprep.subr.bf16.mxu0 0
        %1952 = vmatpush1.bf16.msra.mxu0 0
        %1953 = vmatprep.subr.bf16.mxu0 0
        %1954 = vmatpush1.bf16.msra.mxu0 0
        %1955 = vmatprep.subr.bf16.mxu0 0
        %1956 = vmatpush1.bf16.msra.mxu0 0
        %1957 = vmatprep.mubr.bf16.mxu0 0
        %1958 = vmatmul.mubr.bf16.gmra.mrb[0].mxu0 %v1920
        %v1959 = vpop.f32.mrb[0].mxu0
        %v1960 = vadd.f32 0.0, %v1959
        %v1961 = vpop.f32.mrb[0].mxu0
        %v1962 = vpop.f32.mrb[0].mxu0
        %v1963 = vadd.f32 0.0, %v1962
        %v1964 = vpop.f32.mrb[0].mxu0
        %1965 = vmatprep.mubr.bf16.mxu0 0
        %1966 = vmatmul.mubr.bf16.gmra.mrb[0].mxu0 %v1923
        %v1967 = vpop.f32.mrb[0].mxu0
        %v1968 = vadd.f32 0.0, %v1967
        %v1969 = vpop.f32.mrb[0].mxu0
        %v1970 = vpop.f32.mrb[0].mxu0
        %v1971 = vadd.f32 0.0, %v1970
        %v1972 = vpop.f32.mrb[0].mxu0
        %1973 = vdwg.mxu0
        %1974 = vst [vmem:[%s502 + $0x80] sm:$0xff] %v1960
        %1975 = vst [vmem:[%s502 + $0x88] sm:$0xff] %v1963
        %1976 = vst [vmem:[%s502 + $0x90] sm:$0xff] %v1968
        %1977 = vst [vmem:[%s502 + $0x98] sm:$0xff] %v1971
        %s1978 = scalar_lea.vmem %s509, 128 [#allocation14]
        %1979 = vst.msk [vmem:[%s1978] sm:$0xff] %vm1237, %v1913
        %1980 = vst.msk [vmem:[%s1978 + $0x8] sm:$0xff] %vm1237, %v1914
        %1981 = vst.msk [vmem:[%s1978 + $0x10] sm:$0xff] %vm1237, %v1915
        %1982 = vst.msk [vmem:[%s1978 + $0x18] sm:$0xff] %vm1237, %v1916
        %s1983 = sand.u32 %s248, 1
        %s1984 = scalar_lea.sflag [#allocation4], %s1983
        %s1985 = sand.u32 %s248, 1
        %s1986 = smul.addr %s1985, 160
        %s1987 = scalar_lea.vmem [#allocation13], %s1986
        %s1988 = sand.u32 %s274, 1
        %s1989 = scalar_lea.sflag [#allocation15], %s1988
        %s1990 = sand.u32 %s274, 1
        %s1991 = smul.addr %s1990, 160
        %s1992 = scalar_lea.vmem [#allocation14], %s1991
        // Predicated region
        $region81: #{tpu_custom_call.1} parent=55 // pred_check
          %p1993 = pneg %p258
        $region82: #{tpu_custom_call.1} parent=55 // pred_check_branch
          %1995 = sbr.rel (%p1993) target = $region84
        $region83: #{tpu_custom_call.1} parent=55 // pred_region
          %s1996 = smul.u32 20, %s36
          %s1998 = ssub.s32 2560, 2560
          %1999 = vsyncadd %s1984, %s1998
          %s2000 = smul.addr %s1996, 128
          %s2001 = scalar_lea.hbm %s9, %s2000
          %s2002 = sshll.u32 %s1987, 4
          %s2003 = int_to_ptr.vmem [resolvable:$true] %s2002
          %2008 = dma.vmem_to_hbm [thread:$0]  %s2003, 2560, %s2001, %s1984, 128, 128, 8
        $region84: #{tpu_custom_call.1} parent=55 // pred_fallthru
          _
        // Predicated region
        $region85: #{tpu_custom_call.1} parent=55 // pred_check
          %p2009 = pneg %p284
        $region86: #{tpu_custom_call.1} parent=55 // pred_check_branch
          %2011 = sbr.rel (%p2009) target = $region88
        $region87: #{tpu_custom_call.1} parent=55 // pred_region
          %s2012 = smul.u32 5, %s36
          %s2014 = ssub.s32 2560, 2560
          %2015 = vsyncadd %s1989, %s2014
          %s2016 = smul.addr %s2012, 4
          %s2017 = smul.addr %s2016, 128
          %s2018 = scalar_lea.hbm %s10, %s2017
          %s2019 = sshll.u32 %s1992, 4
          %s2020 = int_to_ptr.vmem [resolvable:$true] %s2019
          %2025 = dma.vmem_to_hbm [thread:$0]  %s2020, 2560, %s2018, %s1989, 128, 128, 8
        $region88: #{tpu_custom_call.1} parent=55 // pred_fallthru
          _
      $region56: #{tpu_custom_call.1} parent=5 // pred_fallthru
        _
      %p2026 = scmp.le.s32.totalorder 2, %s31
      // Predicated region
      $region89: #{tpu_custom_call.1} parent=5 // pred_check
        %p2027 = pneg %p2026
      $region90: #{tpu_custom_call.1} parent=5 // pred_check_branch
        %2029 = sbr.rel (%p2027) target = $region92
      $region91: #{tpu_custom_call.1} parent=5 // pred_region
        %s2030 = ssub.s32 %s31, 2
        // Predicated region
        $region93: #{tpu_custom_call.1} parent=91 // pred_check
          %p2031 = pneg %p264
        $region94: #{tpu_custom_call.1} parent=91 // pred_check_branch
          %2033 = sbr.rel (%p2031) target = $region96
        $region95: #{tpu_custom_call.1} parent=91 // pred_region
          %s2034 = sand.u32 %s249, 1
          %s2035 = scalar_lea.sflag [#allocation4], %s2034
          %s2036 = sand.u32 %s249, 1
          %s2037 = smul.addr %s2036, 160
          %s2038 = scalar_lea.vmem [#allocation13], %s2037
          %2039 = dma.done %s2035, 2560
        $region96: #{tpu_custom_call.1} parent=91 // pred_fallthru
          _
        // Predicated region
        $region97: #{tpu_custom_call.1} parent=91 // pred_check
          %p2040 = pneg %p290
        $region98: #{tpu_custom_call.1} parent=91 // pred_check_branch
          %2042 = sbr.rel (%p2040) target = $region100
        $region99: #{tpu_custom_call.1} parent=91 // pred_region
          %s2043 = sand.u32 %s275, 1
          %s2044 = scalar_lea.sflag [#allocation15], %s2043
          %s2045 = sand.u32 %s275, 1
          %s2046 = smul.addr %s2045, 160
          %s2047 = scalar_lea.vmem [#allocation14], %s2046
          %2048 = dma.done %s2044, 2560
        $region100: #{tpu_custom_call.1} parent=91 // pred_fallthru
          _
      $region92: #{tpu_custom_call.1} parent=5 // pred_fallthru
        _
    $region6: #{tpu_custom_call.1} parent=1 // loop_footer
      %s35 = sadd.s32 1, %s31
    $region7: #{tpu_custom_call.1} parent=1 // loop_footer_branch
      %30 = sbr.rel target = $region3
    $region8: #{tpu_custom_call.1} parent=1 // loop_exit
      _
    %2049 = vsyncpa [#allocation3], 1
    %s2050 = scalar_lea.sflag [#allocation3], 1
    %2051 = vsyncpa %s2050, 1
    %2052 = vsyncpa [#allocation6], 1
    %s2053 = scalar_lea.sflag [#allocation6], 1
    %2054 = vsyncpa %s2053, 1
    %2055 = vsyncpa [#allocation9], 1
    %2056 = vsyncpa [#allocation12], 1
    %2057 = vsyncpa [#allocation4], 1
    %s2058 = scalar_lea.sflag [#allocation4], 1
    %2059 = vsyncpa %s2058, 1
    %2060 = vsyncpa [#allocation15], 1
    %s2061 = scalar_lea.sflag [#allocation15], 1
    %2062 = vsyncpa %s2061, 1

</llo_original>
